<compile_context>
chip_gen: v5e
topology: v5e:2x2
jax: 0.10.0
libtpu: 0.0.40
codegen_flags: <defaults>
</compile_context>

<pallas_src>
import jax
import jax.numpy as jnp
import numpy as np
from jax.experimental import pallas as pl
from jax.experimental.pallas import tpu as pltpu


NUM = 32                      # Hilbert points per input channel (rpm, vel)
HL1, HL2, HL3 = 64, 128, 512  # MLP hidden widths
OUT_DIM = 6                   # true output width
OUT_STORE = 8                 # dense 8-column output (32 B/row HBM writeback)
CONST_ROWS, CONST_COLS = 8, 512
TB = 1024                     # max batch tile (amortizes step overhead + weight pushes)


def _prop_apc2_kernel(x_ref, const_ref, w1_ref, w2_ref, w3_ref, w4_ref, out_ref):
    """One batch tile: fused Hilbertizer features + 4-layer MLP.

    x_ref    : (tb, 2)           f32  rows = [rpm, vel]
    const_ref: (8, 512)          f32  packed constants:
                 row 0: points * (1/spacing)           (lanes 0..2*NUM)
                 row 1: 1/spacing_rpm on lanes [0, NUM), else 0
                 row 2: 1/spacing_vel on lanes [NUM, 2*NUM), else 0
                 row 3..6: b1, b2, b3, b4 (b4 padded to OUT_STORE)
    w1_ref   : (2*NUM, HL1)      bf16
    w2_ref   : (HL1, HL2)        bf16
    w3_ref   : (HL2, HL3)        bf16
    w4_ref   : (HL3, OUT_STORE)  bf16 (zero-padded beyond OUT_DIM columns)
    out_ref  : (tb, OUT_STORE)   f32
    """
    x = x_ref[...]                                    # (tb, 2) f32

    # Load packed 1-row constants once per tile.
    pts   = const_ref[0:1, 0:2 * NUM]                 # (1, 64) pre-scaled points
    s_rpm = const_ref[1:2, 0:2 * NUM]                 # (1, 64) channel-0 scale mask
    s_vel = const_ref[2:3, 0:2 * NUM]                 # (1, 64) channel-1 scale mask
    b1    = const_ref[3:4, 0:HL1]
    b2    = const_ref[4:5, 0:HL2]
    b3    = const_ref[5:6, 0:HL3]
    b4    = const_ref[6:7, 0:OUT_STORE]

    # Hilbertizer, both channels fused into one (tb, 2*NUM) feature tile:
    #   lanes [0, NUM)     : |pts_rpm - rpm| / spacing_rpm
    #   lanes [NUM, 2*NUM) : |pts_vel - vel| / spacing_vel
    # Points are pre-scaled by 1/spacing; relu(abs(.)) == abs(.) so relu dropped.
    xs = x[:, 0:1] * s_rpm + x[:, 1:2] * s_vel        # (tb, 2*NUM)
    feat = jnp.abs(pts - xs)                          # (tb, 2*NUM) f32

    # 4-layer MLP: bf16 MXU inputs, f32 accumulation, bias/ReLU in f32.
    h = jnp.dot(feat.astype(jnp.bfloat16), w1_ref[...],
                preferred_element_type=jnp.float32)
    h = jnp.maximum(h + b1, 0.0)
    h = jnp.dot(h.astype(jnp.bfloat16), w2_ref[...],
                preferred_element_type=jnp.float32)
    h = jnp.maximum(h + b2, 0.0)
    h = jnp.dot(h.astype(jnp.bfloat16), w3_ref[...],
                preferred_element_type=jnp.float32)
    h = jnp.maximum(h + b3, 0.0)
    out = jnp.dot(h.astype(jnp.bfloat16), w4_ref[...],
                  preferred_element_type=jnp.float32) + b4
    out_ref[...] = out.astype(out_ref.dtype)          # dense 8-column store


def make_prop_apc2(max_rpm, max_vel, num, key):
    """Builds deterministic parameters; returns (forward, ref_bf16, ref_f32)."""
    assert num == NUM

    # Hilbertizer points / inverse spacing (pre-scaled at build time).
    pts_rpm = jnp.linspace(0.0, max_rpm, num, dtype=jnp.float32)
    pts_vel = jnp.linspace(0.0, max_vel, num, dtype=jnp.float32)
    inv_rpm = jnp.float32((num - 1) / (max_rpm - 0.0))
    inv_vel = jnp.float32((num - 1) / (max_vel - 0.0))

    pts_scaled = jnp.concatenate([pts_rpm * inv_rpm, pts_vel * inv_vel])      # (64,)
    sel_rpm = jnp.concatenate([jnp.full((num,), inv_rpm, jnp.float32),
                               jnp.zeros((num,), jnp.float32)])
    sel_vel = jnp.concatenate([jnp.zeros((num,), jnp.float32),
                               jnp.full((num,), inv_vel, jnp.float32)])

    # Deterministic PyTorch-style uniform +-1/sqrt(fan_in) linear init.
    def linear_init(k, fan_in, fan_out):
        kw, kb = jax.random.split(k)
        bound = 1.0 / np.sqrt(fan_in)
        w = jax.random.uniform(kw, (fan_in, fan_out), jnp.float32, -bound, bound)
        b = jax.random.uniform(kb, (fan_out,), jnp.float32, -bound, bound)
        return w, b

    k1, k2, k3, k4 = jax.random.split(key, 4)
    w1, b1 = linear_init(k1, 2 * num, HL1)
    w2, b2 = linear_init(k2, HL1, HL2)
    w3, b3 = linear_init(k3, HL2, HL3)
    w4, b4 = linear_init(k4, HL3, OUT_DIM)

    # Zero-pad the last layer to 8 output columns (wrapper slices back to 6).
    w4p = jnp.zeros((HL3, OUT_STORE), jnp.float32).at[:, :OUT_DIM].set(w4)
    b4p = jnp.zeros((OUT_STORE,), jnp.float32).at[:OUT_DIM].set(b4)

    # bf16 weights fed to the MXU (accumulation stays f32).
    w1_bf = w1.astype(jnp.bfloat16)
    w2_bf = w2.astype(jnp.bfloat16)
    w3_bf = w3.astype(jnp.bfloat16)
    w4_bf = w4p.astype(jnp.bfloat16)

    # Pack all small 1-row constants into one (8, 512) f32 buffer.
    const = jnp.zeros((CONST_ROWS, CONST_COLS), jnp.float32)
    const = const.at[0, :2 * num].set(pts_scaled)
    const = const.at[1, :2 * num].set(sel_rpm)
    const = const.at[2, :2 * num].set(sel_vel)
    const = const.at[3, :HL1].set(b1)
    const = const.at[4, :HL2].set(b2)
    const = const.at[5, :HL3].set(b3)
    const = const.at[6, :OUT_STORE].set(b4p)

    weight_bytes = (const.size * 4 + w1_bf.size * 2 + w2_bf.size * 2
                    + w3_bf.size * 2 + w4_bf.size * 2)

    def forward(x):
        x = jnp.asarray(x, jnp.float32)
        if x.ndim == 1:
            x = x[None, :]
        b = x.shape[0]

        # Tile selection:
        #   * ntiles >= 2 whenever possible so dimension_semantics=("parallel",)
        #     actually shards across v7x's two TensorCores,
        #   * tb = round_up(cdiv(b, ntiles), 8) minimizes batch padding,
        #   * tb capped at TB=1024 so per-step overhead / weight pushes amortize
        #     while the VMEM footprint stays a few MiB on every generation.
        ntiles = pl.cdiv(b, TB)
        if ntiles < 2 and b > 8:
            ntiles = 2
        tb = ((b + ntiles - 1) // ntiles + 7) // 8 * 8
        b_pad = ntiles * tb
        if b_pad != b:
            x = jnp.pad(x, ((0, b_pad - b), (0, 0)))

        flops = 2 * b_pad * (2 * NUM * HL1 + HL1 * HL2 + HL2 * HL3 + HL3 * OUT_STORE)
        bytes_accessed = b_pad * 2 * 4 + b_pad * OUT_STORE * 4 + weight_bytes

        out = pl.pallas_call(
            _prop_apc2_kernel,
            out_shape=jax.ShapeDtypeStruct((b_pad, OUT_STORE), jnp.float32),
            grid=(ntiles,),
            in_specs=[
                pl.BlockSpec((tb, 2), lambda i: (i, 0)),                   # x: pipelined
                pl.BlockSpec((CONST_ROWS, CONST_COLS), lambda i: (0, 0)),  # resident
                pl.BlockSpec((2 * NUM, HL1), lambda i: (0, 0)),            # resident
                pl.BlockSpec((HL1, HL2), lambda i: (0, 0)),                # resident
                pl.BlockSpec((HL2, HL3), lambda i: (0, 0)),                # resident
                pl.BlockSpec((HL3, OUT_STORE), lambda i: (0, 0)),          # resident
            ],
            out_specs=pl.BlockSpec((tb, OUT_STORE), lambda i: (i, 0)),
            compiler_params=pltpu.CompilerParams(
                dimension_semantics=("parallel",),
                vmem_limit_bytes=32 * 1024 * 1024),
            cost_estimate=pl.CostEstimate(
                flops=flops, transcendentals=0, bytes_accessed=bytes_accessed),
        )(x, const, w1_bf, w2_bf, w3_bf, w4_bf)
        return out[:b, :OUT_DIM]

    def reference_bf16(x):
        # Plain-JAX mirror of the kernel math (pre-scaled Hilbert features in
        # f32, bf16 matmul inputs, f32 accumulation) for a tight numeric check.
        x = jnp.asarray(x, jnp.float32)
        if x.ndim == 1:
            x = x[None, :]
        xs = x[:, 0:1] * sel_rpm[None, :] + x[:, 1:2] * sel_vel[None, :]
        h = jnp.abs(pts_scaled[None, :] - xs)

        def dense(h, w_bf, b_row):
            return jnp.dot(h.astype(jnp.bfloat16), w_bf,
                           preferred_element_type=jnp.float32) + b_row[None, :]

        h = jnp.maximum(dense(h, w1_bf, b1), 0.0)
        h = jnp.maximum(dense(h, w2_bf, b2), 0.0)
        h = jnp.maximum(dense(h, w3_bf, b3), 0.0)
        return dense(h, w4_bf, b4p)[:, :OUT_DIM]

    def reference_f32(x):
        # Pure-f32 mirror of the original PyTorch Hilbertizer + MLP (fidelity
        # check with an explicit error budget for the bf16 kernel internals).
        x = jnp.asarray(x, jnp.float32)
        if x.ndim == 1:
            x = x[None, :]
        feat_rpm = jnp.abs(pts_rpm[None, :] - x[:, 0:1]) * inv_rpm
        feat_vel = jnp.abs(pts_vel[None, :] - x[:, 1:2]) * inv_vel
        h = jnp.maximum(jnp.concatenate([feat_rpm, feat_vel], axis=1), 0.0)
        h = jnp.maximum(h @ w1 + b1[None, :], 0.0)
        h = jnp.maximum(h @ w2 + b2[None, :], 0.0)
        h = jnp.maximum(h @ w3 + b3[None, :], 0.0)
        return h @ w4 + b4[None, :]

    return forward, reference_bf16, reference_f32


if __name__ == "__main__":
    num = NUM
    max_rpm = 4000.0
    max_vel = 30.0
    B = 512          # -> 2 tiles of 256 rows: exercises the grid, pipelining, 2-TC split

    key = jax.random.PRNGKey(0)
    kparam, kx = jax.random.split(key)
    forward, reference_bf16, reference_f32 = make_prop_apc2(max_rpm, max_vel, num, kparam)

    # Example input: column 0 = rpm in [0, max_rpm], column 1 = vel in [0, max_vel].
    u = jax.random.uniform(kx, (B, 2), jnp.float32)
    x = u * jnp.array([[max_rpm, max_vel]], dtype=jnp.float32)

    out = jax.block_until_ready(forward(x))
    ref = jax.block_until_ready(reference_bf16(x))
    ref32 = jax.block_until_ready(reference_f32(x))

    if out.shape != (B, OUT_DIM):
        raise AssertionError(f"bad output shape {out.shape}")
    # Tight self-consistency check against the bf16-mirror reference.
    if not np.allclose(np.asarray(out), np.asarray(ref), rtol=2e-3, atol=2e-3):
        raise AssertionError("Pallas kernel output mismatch vs bf16 JAX reference")
    # Fidelity check vs the pure-f32 original math; explicit error budget for
    # the bf16 weights/activations inside the kernel.
    if not np.allclose(np.asarray(out), np.asarray(ref32), rtol=5e-2, atol=5e-2):
        raise AssertionError("Pallas kernel output outside f32 fidelity budget")

    print("KERNEL_OK")
</pallas_src>

<mosaic_0001>
module attributes {stable_mosaic.version = 11 : i64} {
  func.func @_prop_apc2_kernel(%arg0: i32, %arg1: memref<256x2xf32, #tpu.memory_space<vmem>>, %arg2: memref<8x512xf32, #tpu.memory_space<vmem>>, %arg3: memref<64x64xbf16, #tpu.memory_space<vmem>>, %arg4: memref<64x128xbf16, #tpu.memory_space<vmem>>, %arg5: memref<128x512xbf16, #tpu.memory_space<vmem>>, %arg6: memref<512x8xbf16, #tpu.memory_space<vmem>>, %arg7: memref<256x8xf32, #tpu.memory_space<vmem>>) attributes {dimension_semantics = [#tpu.dimension_semantics<parallel>], iteration_bounds = array<i64: 2>, scalar_prefetch = 0 : i64, scratch_operands = 0 : i64, tpu.core_type = #tpu.core_type<tc>, window_params = [{transform_indices = @transform_0, window_bounds = array<i64: 256, 2>}, {pipeline_mode = #tpu.pipeline_mode<synchronous>, transform_indices = @transform_1, window_bounds = array<i64: 8, 512>}, {pipeline_mode = #tpu.pipeline_mode<synchronous>, transform_indices = @transform_2, window_bounds = array<i64: 64, 64>}, {pipeline_mode = #tpu.pipeline_mode<synchronous>, transform_indices = @transform_3, window_bounds = array<i64: 64, 128>}, {pipeline_mode = #tpu.pipeline_mode<synchronous>, transform_indices = @transform_4, window_bounds = array<i64: 128, 512>}, {pipeline_mode = #tpu.pipeline_mode<synchronous>, transform_indices = @transform_5, window_bounds = array<i64: 512, 8>}, {transform_indices = @transform_6, window_bounds = array<i64: 256, 8>}]} {
    %c0 = arith.constant 0 : index
    %c0_0 = arith.constant 0 : index
    %0 = vector.load %arg1[%c0, %c0_0] : memref<256x2xf32, #tpu.memory_space<vmem>>, vector<256x2xf32>
    %c0_1 = arith.constant 0 : index
    %c0_2 = arith.constant 0 : index
    %1 = vector.load %arg2[%c0_1, %c0_2] : memref<8x512xf32, #tpu.memory_space<vmem>>, vector<1x64xf32>
    %c1 = arith.constant 1 : index
    %c0_3 = arith.constant 0 : index
    %2 = vector.load %arg2[%c1, %c0_3] : memref<8x512xf32, #tpu.memory_space<vmem>>, vector<1x64xf32>
    %c2 = arith.constant 2 : index
    %c0_4 = arith.constant 0 : index
    %3 = vector.load %arg2[%c2, %c0_4] : memref<8x512xf32, #tpu.memory_space<vmem>>, vector<1x64xf32>
    %c3 = arith.constant 3 : index
    %c0_5 = arith.constant 0 : index
    %4 = vector.load %arg2[%c3, %c0_5] : memref<8x512xf32, #tpu.memory_space<vmem>>, vector<1x64xf32>
    %c4 = arith.constant 4 : index
    %c0_6 = arith.constant 0 : index
    %5 = vector.load %arg2[%c4, %c0_6] : memref<8x512xf32, #tpu.memory_space<vmem>>, vector<1x128xf32>
    %c5 = arith.constant 5 : index
    %c0_7 = arith.constant 0 : index
    %6 = vector.load %arg2[%c5, %c0_7] : memref<8x512xf32, #tpu.memory_space<vmem>>, vector<1x512xf32>
    %c6 = arith.constant 6 : index
    %c0_8 = arith.constant 0 : index
    %7 = vector.load %arg2[%c6, %c0_8] : memref<8x512xf32, #tpu.memory_space<vmem>>, vector<1x8xf32>
    %8 = vector.extract_strided_slice %0 {offsets = [0, 0], sizes = [256, 1], strides = [1, 1]} : vector<256x2xf32> to vector<256x1xf32>
    %9 = vector.broadcast %8 : vector<256x1xf32> to vector<256x64xf32>
    %10 = vector.broadcast %2 : vector<1x64xf32> to vector<256x64xf32>
    %11 = arith.mulf %9, %10 : vector<256x64xf32>
    %12 = vector.extract_strided_slice %0 {offsets = [0, 1], sizes = [256, 1], strides = [1, 1]} : vector<256x2xf32> to vector<256x1xf32>
    %13 = vector.broadcast %12 : vector<256x1xf32> to vector<256x64xf32>
    %14 = vector.broadcast %3 : vector<1x64xf32> to vector<256x64xf32>
    %15 = arith.mulf %13, %14 : vector<256x64xf32>
    %16 = arith.addf %11, %15 : vector<256x64xf32>
    %17 = vector.broadcast %1 : vector<1x64xf32> to vector<256x64xf32>
    %18 = arith.subf %17, %16 : vector<256x64xf32>
    %19 = math.absf %18 : vector<256x64xf32>
    %20 = arith.truncf %19 : vector<256x64xf32> to vector<256x64xbf16>
    %c0_9 = arith.constant 0 : index
    %c0_10 = arith.constant 0 : index
    %21 = vector.load %arg3[%c0_9, %c0_10] : memref<64x64xbf16, #tpu.memory_space<vmem>>, vector<64x64xbf16>
    %cst = arith.constant dense<0.000000e+00> : vector<256x64xf32>
    %22 = tpu.matmul %20, %21, %cst {dimension_numbers = #tpu.dot_dimension_numbers<[1], [0], [0], [1], [0, 0, 1, 1], [], []>} : vector<256x64xbf16>, vector<64x64xbf16>, vector<256x64xf32> -> vector<256x64xf32>
    %23 = vector.broadcast %4 : vector<1x64xf32> to vector<256x64xf32>
    %24 = arith.addf %22, %23 : vector<256x64xf32>
    %cst_11 = arith.constant 0.000000e+00 : f32
    %25 = vector.broadcast %cst_11 : f32 to vector<256x64xf32>
    %26 = arith.maximumf %24, %25 : vector<256x64xf32>
    %27 = arith.truncf %26 : vector<256x64xf32> to vector<256x64xbf16>
    %c0_12 = arith.constant 0 : index
    %c0_13 = arith.constant 0 : index
    %28 = vector.load %arg4[%c0_12, %c0_13] : memref<64x128xbf16, #tpu.memory_space<vmem>>, vector<64x128xbf16>
    %cst_14 = arith.constant dense<0.000000e+00> : vector<256x128xf32>
    %29 = tpu.matmul %27, %28, %cst_14 {dimension_numbers = #tpu.dot_dimension_numbers<[1], [0], [0], [1], [0, 0, 1, 1], [], []>} : vector<256x64xbf16>, vector<64x128xbf16>, vector<256x128xf32> -> vector<256x128xf32>
    %30 = vector.broadcast %5 : vector<1x128xf32> to vector<256x128xf32>
    %31 = arith.addf %29, %30 : vector<256x128xf32>
    %cst_15 = arith.constant 0.000000e+00 : f32
    %32 = vector.broadcast %cst_15 : f32 to vector<256x128xf32>
    %33 = arith.maximumf %31, %32 : vector<256x128xf32>
    %34 = arith.truncf %33 : vector<256x128xf32> to vector<256x128xbf16>
    %c0_16 = arith.constant 0 : index
    %c0_17 = arith.constant 0 : index
    %35 = vector.load %arg5[%c0_16, %c0_17] : memref<128x512xbf16, #tpu.memory_space<vmem>>, vector<128x512xbf16>
    %cst_18 = arith.constant dense<0.000000e+00> : vector<256x512xf32>
    %36 = tpu.matmul %34, %35, %cst_18 {dimension_numbers = #tpu.dot_dimension_numbers<[1], [0], [0], [1], [0, 0, 1, 1], [], []>} : vector<256x128xbf16>, vector<128x512xbf16>, vector<256x512xf32> -> vector<256x512xf32>
    %37 = vector.broadcast %6 : vector<1x512xf32> to vector<256x512xf32>
    %38 = arith.addf %36, %37 : vector<256x512xf32>
    %cst_19 = arith.constant 0.000000e+00 : f32
    %39 = vector.broadcast %cst_19 : f32 to vector<256x512xf32>
    %40 = arith.maximumf %38, %39 : vector<256x512xf32>
    %41 = arith.truncf %40 : vector<256x512xf32> to vector<256x512xbf16>
    %c0_20 = arith.constant 0 : index
    %c0_21 = arith.constant 0 : index
    %42 = vector.load %arg6[%c0_20, %c0_21] : memref<512x8xbf16, #tpu.memory_space<vmem>>, vector<512x8xbf16>
    %cst_22 = arith.constant dense<0.000000e+00> : vector<256x8xf32>
    %43 = tpu.matmul %41, %42, %cst_22 {dimension_numbers = #tpu.dot_dimension_numbers<[1], [0], [0], [1], [0, 0, 1, 1], [], []>} : vector<256x512xbf16>, vector<512x8xbf16>, vector<256x8xf32> -> vector<256x8xf32>
    %44 = vector.broadcast %7 : vector<1x8xf32> to vector<256x8xf32>
    %45 = arith.addf %43, %44 : vector<256x8xf32>
    %c0_23 = arith.constant 0 : index
    %c0_24 = arith.constant 0 : index
    %46 = vector.load %arg7[%c0_23, %c0_24] : memref<256x8xf32, #tpu.memory_space<vmem>>, vector<256x8xf32>
    tpu.vector_store %arg7[%c0_23, %c0_24], %45 {strides = array<i32>} : memref<256x8xf32, #tpu.memory_space<vmem>>, vector<256x8xf32>,
    return
  }
  func.func @transform_0(%arg0: i32) -> (i32, i32) {
    %c0_i32 = arith.constant 0 : i32
    %c0_i32_0 = arith.constant 0 : i32
    return %arg0, %c0_i32 : i32, i32
  }
  func.func @transform_1(%arg0: i32) -> (i32, i32) {
    %c0_i32 = arith.constant 0 : i32
    %c0_i32_0 = arith.constant 0 : i32
    %c0_i32_1 = arith.constant 0 : i32
    return %c0_i32, %c0_i32_0 : i32, i32
  }
  func.func @transform_2(%arg0: i32) -> (i32, i32) {
    %c0_i32 = arith.constant 0 : i32
    %c0_i32_0 = arith.constant 0 : i32
    %c0_i32_1 = arith.constant 0 : i32
    return %c0_i32, %c0_i32_0 : i32, i32
  }
  func.func @transform_3(%arg0: i32) -> (i32, i32) {
    %c0_i32 = arith.constant 0 : i32
    %c0_i32_0 = arith.constant 0 : i32
    %c0_i32_1 = arith.constant 0 : i32
    return %c0_i32, %c0_i32_0 : i32, i32
  }
  func.func @transform_4(%arg0: i32) -> (i32, i32) {
    %c0_i32 = arith.constant 0 : i32
    %c0_i32_0 = arith.constant 0 : i32
    %c0_i32_1 = arith.constant 0 : i32
    return %c0_i32, %c0_i32_0 : i32, i32
  }
  func.func @transform_5(%arg0: i32) -> (i32, i32) {
    %c0_i32 = arith.constant 0 : i32
    %c0_i32_0 = arith.constant 0 : i32
    %c0_i32_1 = arith.constant 0 : i32
    return %c0_i32, %c0_i32_0 : i32, i32
  }
  func.func @transform_6(%arg0: i32) -> (i32, i32) {
    %c0_i32 = arith.constant 0 : i32
    %c0_i32_0 = arith.constant 0 : i32
    return %arg0, %c0_i32 : i32, i32
  }
}

</mosaic_0001>

<llo_original>
// kernel: tpu_custom_call.1
$region0: #{tpu_custom_call.1}
  #allocation0 [shape = 'u32[]', space=smem, size = 0x4, offset = 0x4, fixed_abs, tag = 'smem constant byte address 0x4 - core index']
  #allocation1 [shape = 'u32[72,128]{1,0:T(1,128)}', space=vmem, size = 0x9000, scoped, tag = 'internal scratch']
  %s0 = inlined_call_operand.vmem [shape: f32[512,2], index: 0, kind: input, shape index: {}]
  %s1 = inlined_call_operand.vmem [shape: f32[8,512], index: 1, kind: input, shape index: {}]
  %s2 = inlined_call_operand.vmem [shape: bf16[64,64], index: 2, kind: input, shape index: {}]
  %s3 = inlined_call_operand.vmem [shape: bf16[64,128], index: 3, kind: input, shape index: {}]
  %s4 = inlined_call_operand.vmem [shape: bf16[128,512], index: 4, kind: input, shape index: {}]
  %s5 = inlined_call_operand.vmem [shape: bf16[512,8], index: 5, kind: input, shape index: {}]
  %s6 = inlined_call_operand.vmem [shape: f32[512,8], index: 6, kind: output, shape index: {}]
  %s7 = sld [smem:[#allocation0]]
  $region57: #{tpu_custom_call.1} parent=0
    _
  %s9 = ssub.s32 1, %s7
  %s10 = scalar_select 0, %s9, %s7
  loop: start=0, step=1, limit=4
  $region2: #{tpu_custom_call.1} parent=0 // loop_pre_header
    _
  $region3: #{tpu_custom_call.1} parent=0 // loop_header
    %s12 = sphi 0, %s16
    %p13 = scmp.ge.s32.totalorder %s12, 4
    %s22 = sphi 0, %s24
    %s25 = sphi 0, %s22
    %s26 = sphi 0, %s25
    %s42 = sphi 0, %s26
    %s46 = sphi 0, %s46
    %s48 = sphi 0, %s46
    %s49 = sphi 0, %s48
    %s63 = sphi 0, %s49
    %s67 = sphi 0, %s67
    %s69 = sphi 0, %s67
    %s70 = sphi 0, %s69
    %s84 = sphi 0, %s70
    %s88 = sphi 0, %s88
    %s90 = sphi 0, %s88
    %s91 = sphi 0, %s90
    %s105 = sphi 0, %s91
    %s109 = sphi 0, %s109
    %s111 = sphi 0, %s109
    %s112 = sphi 0, %s111
    %s126 = sphi 0, %s112
    %s130 = sphi 0, %s130
    %s132 = sphi 0, %s130
    %s133 = sphi 0, %s132
    %s147 = sphi 0, %s133
    %s153 = sphi 0, %s155
    %s156 = sphi 0, %s153
    %s157 = sphi 0, %s156
    %s173 = sphi 0, %s157
  $region4: #{tpu_custom_call.1} parent=0 // loop_header_branch
    %15 = sbr.rel (%p13) target = $region8
  $region5: #{tpu_custom_call.1} parent=0 // loop_body
    %s17 = ssub.s32 %s12, 1
    %s18 = ssub.s32 %s12, 2
    %s19 = sadd.s32 %s12, 1
    %s20 = ssub.s32 %s12, %s19
    %p21 = scmp.eq.s32.totalorder %s20, 0
    %s23 = sadd.s32 %s22, 1
    %s24 = scalar_select %p21, %s22, %s23
    %p27 = pneg %p21
    %p28 = scmp.eq.s32.totalorder %s12, 1
    %p29 = por %p27, %p28
    %p30 = scmp.ne.s32.totalorder %s22, %s25
    %p31 = scmp.eq.s32.totalorder %s12, 0
    %p32 = por %p30, %p31
    %p33 = scmp.ne.s32.totalorder %s22, %s25
    %p34 = scmp.eq.s32.totalorder %s17, 1
    %p35 = por %p33, %p34
    %p36 = scmp.ne.s32.totalorder %s25, %s26
    %p37 = scmp.eq.s32.totalorder %s17, 0
    %p38 = por %p36, %p37
    %p39 = scmp.ne.s32.totalorder %s25, %s26
    %p40 = scmp.eq.s32.totalorder %s18, 1
    %p41 = por %p39, %p40
    %p43 = scmp.ne.s32.totalorder %s26, %s42
    %p44 = scmp.eq.s32.totalorder %s18, 0
    %p45 = por %p43, %p44
    %s47 = sadd.s32 %s46, 1
    %p50 = scmp.eq.s32.totalorder %s12, 1
    %p51 = scmp.ne.s32.totalorder %s46, %s48
    %p52 = scmp.eq.s32.totalorder %s12, 0
    %p53 = por %p51, %p52
    %p54 = scmp.ne.s32.totalorder %s46, %s48
    %p55 = scmp.eq.s32.totalorder %s17, 1
    %p56 = por %p54, %p55
    %p57 = scmp.ne.s32.totalorder %s48, %s49
    %p58 = scmp.eq.s32.totalorder %s17, 0
    %p59 = por %p57, %p58
    %p60 = scmp.ne.s32.totalorder %s48, %s49
    %p61 = scmp.eq.s32.totalorder %s18, 1
    %p62 = por %p60, %p61
    %p64 = scmp.ne.s32.totalorder %s49, %s63
    %p65 = scmp.eq.s32.totalorder %s18, 0
    %p66 = por %p64, %p65
    %s68 = sadd.s32 %s67, 1
    %p71 = scmp.eq.s32.totalorder %s12, 1
    %p72 = scmp.ne.s32.totalorder %s67, %s69
    %p73 = scmp.eq.s32.totalorder %s12, 0
    %p74 = por %p72, %p73
    %p75 = scmp.ne.s32.totalorder %s67, %s69
    %p76 = scmp.eq.s32.totalorder %s17, 1
    %p77 = por %p75, %p76
    %p78 = scmp.ne.s32.totalorder %s69, %s70
    %p79 = scmp.eq.s32.totalorder %s17, 0
    %p80 = por %p78, %p79
    %p81 = scmp.ne.s32.totalorder %s69, %s70
    %p82 = scmp.eq.s32.totalorder %s18, 1
    %p83 = por %p81, %p82
    %p85 = scmp.ne.s32.totalorder %s70, %s84
    %p86 = scmp.eq.s32.totalorder %s18, 0
    %p87 = por %p85, %p86
    %s89 = sadd.s32 %s88, 1
    %p92 = scmp.eq.s32.totalorder %s12, 1
    %p93 = scmp.ne.s32.totalorder %s88, %s90
    %p94 = scmp.eq.s32.totalorder %s12, 0
    %p95 = por %p93, %p94
    %p96 = scmp.ne.s32.totalorder %s88, %s90
    %p97 = scmp.eq.s32.totalorder %s17, 1
    %p98 = por %p96, %p97
    %p99 = scmp.ne.s32.totalorder %s90, %s91
    %p100 = scmp.eq.s32.totalorder %s17, 0
    %p101 = por %p99, %p100
    %p102 = scmp.ne.s32.totalorder %s90, %s91
    %p103 = scmp.eq.s32.totalorder %s18, 1
    %p104 = por %p102, %p103
    %p106 = scmp.ne.s32.totalorder %s91, %s105
    %p107 = scmp.eq.s32.totalorder %s18, 0
    %p108 = por %p106, %p107
    %s110 = sadd.s32 %s109, 1
    %p113 = scmp.eq.s32.totalorder %s12, 1
    %p114 = scmp.ne.s32.totalorder %s109, %s111
    %p115 = scmp.eq.s32.totalorder %s12, 0
    %p116 = por %p114, %p115
    %p117 = scmp.ne.s32.totalorder %s109, %s111
    %p118 = scmp.eq.s32.totalorder %s17, 1
    %p119 = por %p117, %p118
    %p120 = scmp.ne.s32.totalorder %s111, %s112
    %p121 = scmp.eq.s32.totalorder %s17, 0
    %p122 = por %p120, %p121
    %p123 = scmp.ne.s32.totalorder %s111, %s112
    %p124 = scmp.eq.s32.totalorder %s18, 1
    %p125 = por %p123, %p124
    %p127 = scmp.ne.s32.totalorder %s112, %s126
    %p128 = scmp.eq.s32.totalorder %s18, 0
    %p129 = por %p127, %p128
    %s131 = sadd.s32 %s130, 1
    %p134 = scmp.eq.s32.totalorder %s12, 1
    %p135 = scmp.ne.s32.totalorder %s130, %s132
    %p136 = scmp.eq.s32.totalorder %s12, 0
    %p137 = por %p135, %p136
    %p138 = scmp.ne.s32.totalorder %s130, %s132
    %p139 = scmp.eq.s32.totalorder %s17, 1
    %p140 = por %p138, %p139
    %p141 = scmp.ne.s32.totalorder %s132, %s133
    %p142 = scmp.eq.s32.totalorder %s17, 0
    %p143 = por %p141, %p142
    %p144 = scmp.ne.s32.totalorder %s132, %s133
    %p145 = scmp.eq.s32.totalorder %s18, 1
    %p146 = por %p144, %p145
    %p148 = scmp.ne.s32.totalorder %s133, %s147
    %p149 = scmp.eq.s32.totalorder %s18, 0
    %p150 = por %p148, %p149
    %s151 = ssub.s32 %s12, %s19
    %p152 = scmp.eq.s32.totalorder %s151, 0
    %s154 = sadd.s32 %s153, 1
    %s155 = scalar_select %p152, %s153, %s154
    %p158 = pneg %p152
    %p159 = scmp.eq.s32.totalorder %s12, 1
    %p160 = por %p158, %p159
    %p161 = scmp.ne.s32.totalorder %s153, %s156
    %p162 = scmp.eq.s32.totalorder %s12, 0
    %p163 = por %p161, %p162
    %p164 = scmp.ne.s32.totalorder %s153, %s156
    %p165 = scmp.eq.s32.totalorder %s17, 1
    %p166 = por %p164, %p165
    %p167 = scmp.ne.s32.totalorder %s156, %s157
    %p168 = scmp.eq.s32.totalorder %s17, 0
    %p169 = por %p167, %p168
    %p170 = scmp.ne.s32.totalorder %s156, %s157
    %p171 = scmp.eq.s32.totalorder %s18, 1
    %p172 = por %p170, %p171
    %p174 = scmp.ne.s32.totalorder %s157, %s173
    %p175 = scmp.eq.s32.totalorder %s18, 0
    %p176 = por %p174, %p175
    %p177 = scmp.le.s32.totalorder 1, %s12
    %p178 = scmp.lt.s32.totalorder %s12, 3
    %p179 = pnand %p177, %p178
    %p180 = pneg %p179
    // Predicated region
    $region9: #{tpu_custom_call.1} parent=5 // pred_check
      _
    $region10: #{tpu_custom_call.1} parent=5 // pred_check_branch
      %182 = sbr.rel (%p179) target = $region12
    $region11: #{tpu_custom_call.1} parent=5 // pred_region
      %s183 = ssub.s32 %s12, 1
      // Predicated region
      $region13: #{tpu_custom_call.1} parent=11 // pred_check
        %p184 = pneg %p59
      $region14: #{tpu_custom_call.1} parent=11 // pred_check_branch
        %186 = sbr.rel (%p184) target = $region16
      $region15: #{tpu_custom_call.1} parent=11 // pred_region
        _
      $region16: #{tpu_custom_call.1} parent=11 // pred_fallthru
        _
      // Predicated region
      $region17: #{tpu_custom_call.1} parent=11 // pred_check
        %p187 = pneg %p80
      $region18: #{tpu_custom_call.1} parent=11 // pred_check_branch
        %189 = sbr.rel (%p187) target = $region20
      $region19: #{tpu_custom_call.1} parent=11 // pred_region
        _
      $region20: #{tpu_custom_call.1} parent=11 // pred_fallthru
        _
      // Predicated region
      $region21: #{tpu_custom_call.1} parent=11 // pred_check
        %p190 = pneg %p101
      $region22: #{tpu_custom_call.1} parent=11 // pred_check_branch
        %192 = sbr.rel (%p190) target = $region24
      $region23: #{tpu_custom_call.1} parent=11 // pred_region
        _
      $region24: #{tpu_custom_call.1} parent=11 // pred_fallthru
        _
      // Predicated region
      $region25: #{tpu_custom_call.1} parent=11 // pred_check
        %p193 = pneg %p122
      $region26: #{tpu_custom_call.1} parent=11 // pred_check_branch
        %195 = sbr.rel (%p193) target = $region28
      $region27: #{tpu_custom_call.1} parent=11 // pred_region
        _
      $region28: #{tpu_custom_call.1} parent=11 // pred_fallthru
        _
      // Predicated region
      $region29: #{tpu_custom_call.1} parent=11 // pred_check
        %p196 = pneg %p143
      $region30: #{tpu_custom_call.1} parent=11 // pred_check_branch
        %198 = sbr.rel (%p196) target = $region32
      $region31: #{tpu_custom_call.1} parent=11 // pred_region
        _
      $region32: #{tpu_custom_call.1} parent=11 // pred_fallthru
        _
    $region12: #{tpu_custom_call.1} parent=5 // pred_fallthru
      _
    %p199 = scmp.lt.s32.totalorder %s12, 2
    // Predicated region
    $region33: #{tpu_custom_call.1} parent=5 // pred_check
      %p200 = pneg %p199
    $region34: #{tpu_custom_call.1} parent=5 // pred_check_branch
      %202 = sbr.rel (%p200) target = $region36
    $region35: #{tpu_custom_call.1} parent=5 // pred_region
      // Predicated region
      $region37: #{tpu_custom_call.1} parent=35 // pred_check
        %p203 = pneg %p32
      $region38: #{tpu_custom_call.1} parent=35 // pred_check_branch
        %205 = sbr.rel (%p203) target = $region40
      $region39: #{tpu_custom_call.1} parent=35 // pred_region
        %s206 = smul.u32 32, %s12
        %p207 = scmp.lt.s32.totalorder %s206, 63
        %s208 = scalar_select %p207, %s206, 63
        %s209 = smul.addr %s208, 8
        %s210 = scalar_lea.vmem %s0, %s209
        %s211 = smul.u32 32, %s12
      $region40: #{tpu_custom_call.1} parent=35 // pred_fallthru
        _
    $region36: #{tpu_custom_call.1} parent=5 // pred_fallthru
      _
    %p212 = scmp.le.s32.totalorder 1, %s12
    %p213 = scmp.lt.s32.totalorder %s12, 3
    %p214 = pnand %p212, %p213
    %p215 = pneg %p214
    // Predicated region
    $region41: #{tpu_custom_call.1} parent=5 // pred_check
      _
    $region42: #{tpu_custom_call.1} parent=5 // pred_check_branch
      %217 = sbr.rel (%p214) target = $region44
    $region43: #{tpu_custom_call.1} parent=5 // pred_region
      %s218 = ssub.s32 %s12, 1
      %s219 = smul.u32 32, %s17
      %p220 = scmp.lt.s32.totalorder %s219, 63
      %s221 = scalar_select %p220, %s219, 63
      %s222 = smul.addr %s221, 8
      %s223 = scalar_lea.vmem %s0, %s222
      %p224 = pneg %p38
      %p225 = pneg %p35
      %p226 = pneg %p59
      %p227 = pneg %p56
      %p228 = pneg %p80
      %p229 = pneg %p77
      %p230 = pneg %p101
      %p231 = pneg %p98
      %p232 = pneg %p122
      %p233 = pneg %p119
      %p234 = pneg %p143
      %p235 = pneg %p140
      %p236 = pneg %p169
      %p237 = pneg %p166
      %s238 = smul.u32 32, %s17
      %p239 = scmp.lt.s32.totalorder %s238, 63
      %s240 = scalar_select %p239, %s238, 63
      %s241 = smul.addr %s240, 8
      %s242 = scalar_lea.vmem %s6, %s241
      %s243 = smul.u32 32, %s17
      %p244 = scmp.lt.s32.totalorder %s243, 63
      %s245 = scalar_select %p244, %s243, 63
      %s246 = smul.addr %s245, 8
      %s247 = scalar_lea.vmem %s0, %s246
      %s248 = smul.u32 32, %s17
      %s249 = smul.u32 32, %s17
      %p250 = scmp.lt.s32.totalorder %s249, 63
      %s251 = scalar_select %p250, %s249, 63
      %s252 = smul.addr %s251, 8
      %s253 = scalar_lea.vmem %s6, %s252
      %s254 = smul.u32 32, %s17
      %v256 = vld [vmem:[%s247] sm:$0xff]
      %v257 = vld [vmem:[%s247 + $0x8] sm:$0xff]
      %v258 = vld [vmem:[%s247 + $0x10] sm:$0xff]
      %v259 = vld [vmem:[%s247 + $0x18] sm:$0xff]
      %v260 = vld [vmem:[%s247 + $0x20] sm:$0xff]
      %v261 = vld [vmem:[%s247 + $0x28] sm:$0xff]
      %v262 = vld [vmem:[%s247 + $0x30] sm:$0xff]
      %v263 = vld [vmem:[%s247 + $0x38] sm:$0xff]
      %v264 = vld [vmem:[%s247 + $0x40] sm:$0xff]
      %v265 = vld [vmem:[%s247 + $0x48] sm:$0xff]
      %v266 = vld [vmem:[%s247 + $0x50] sm:$0xff]
      %v267 = vld [vmem:[%s247 + $0x58] sm:$0xff]
      %v268 = vld [vmem:[%s247 + $0x60] sm:$0xff]
      %v269 = vld [vmem:[%s247 + $0x68] sm:$0xff]
      %v270 = vld [vmem:[%s247 + $0x70] sm:$0xff]
      %v271 = vld [vmem:[%s247 + $0x78] sm:$0xff]
      %v272 = vld [vmem:[%s247 + $0x80] sm:$0xff]
      %v273 = vld [vmem:[%s247 + $0x88] sm:$0xff]
      %v274 = vld [vmem:[%s247 + $0x90] sm:$0xff]
      %v275 = vld [vmem:[%s247 + $0x98] sm:$0xff]
      %v276 = vld [vmem:[%s247 + $0xa0] sm:$0xff]
      %v277 = vld [vmem:[%s247 + $0xa8] sm:$0xff]
      %v278 = vld [vmem:[%s247 + $0xb0] sm:$0xff]
      %v279 = vld [vmem:[%s247 + $0xb8] sm:$0xff]
      %v280 = vld [vmem:[%s247 + $0xc0] sm:$0xff]
      %v281 = vld [vmem:[%s247 + $0xc8] sm:$0xff]
      %v282 = vld [vmem:[%s247 + $0xd0] sm:$0xff]
      %v283 = vld [vmem:[%s247 + $0xd8] sm:$0xff]
      %v284 = vld [vmem:[%s247 + $0xe0] sm:$0xff]
      %v285 = vld [vmem:[%s247 + $0xe8] sm:$0xff]
      %v286 = vld [vmem:[%s247 + $0xf0] sm:$0xff]
      %v287 = vld [vmem:[%s247 + $0xf8] sm:$0xff]
      %v288 = vld [vmem:[%s1] ss:$0 sm:$0xff]
      %v289 = vld [vmem:[%s1 + $0x1] ss:$0 sm:$0xff]
      %v290 = vld [vmem:[%s1 + $0x2] ss:$0 sm:$0xff]
      %v291 = vld [vmem:[%s1 + $0x3] ss:$0 sm:$0xff]
      %v292 = vld [vmem:[%s1 + $0x4] ss:$0 sm:$0xff]
      %s293 = scalar_lea.vmem %s1, 5
      %v294 = vld [vmem:[%s293] ss:$8 sm:$0xf]
      %v295 = vld [vmem:[%s1 + $0x6] ss:$0 sm:$0xff]
      %297 = vset.pattern.permute.xlu0 0
      %298 = vperm.xlu0 %297, %v256
      %v299 = vpop.permute.xlu0 %298
      %302 = vset.pattern.permute.xlu0 0
      %303 = vperm.xlu0 %302, %v257
      %v304 = vpop.permute.xlu0 %303
      %307 = vset.pattern.permute.xlu0 0
      %308 = vperm.xlu0 %307, %v258
      %v309 = vpop.permute.xlu0 %308
      %312 = vset.pattern.permute.xlu0 0
      %313 = vperm.xlu0 %312, %v259
      %v314 = vpop.permute.xlu0 %313
      %317 = vset.pattern.permute.xlu0 0
      %318 = vperm.xlu0 %317, %v260
      %v319 = vpop.permute.xlu0 %318
      %322 = vset.pattern.permute.xlu0 0
      %323 = vperm.xlu0 %322, %v261
      %v324 = vpop.permute.xlu0 %323
      %327 = vset.pattern.permute.xlu0 0
      %328 = vperm.xlu0 %327, %v262
      %v329 = vpop.permute.xlu0 %328
      %332 = vset.pattern.permute.xlu0 0
      %333 = vperm.xlu0 %332, %v263
      %v334 = vpop.permute.xlu0 %333
      %337 = vset.pattern.permute.xlu0 0
      %338 = vperm.xlu0 %337, %v264
      %v339 = vpop.permute.xlu0 %338
      %342 = vset.pattern.permute.xlu0 0
      %343 = vperm.xlu0 %342, %v265
      %v344 = vpop.permute.xlu0 %343
      %347 = vset.pattern.permute.xlu0 0
      %348 = vperm.xlu0 %347, %v266
      %v349 = vpop.permute.xlu0 %348
      %352 = vset.pattern.permute.xlu0 0
      %353 = vperm.xlu0 %352, %v267
      %v354 = vpop.permute.xlu0 %353
      %357 = vset.pattern.permute.xlu0 0
      %358 = vperm.xlu0 %357, %v268
      %v359 = vpop.permute.xlu0 %358
      %362 = vset.pattern.permute.xlu0 0
      %363 = vperm.xlu0 %362, %v269
      %v364 = vpop.permute.xlu0 %363
      %367 = vset.pattern.permute.xlu0 0
      %368 = vperm.xlu0 %367, %v270
      %v369 = vpop.permute.xlu0 %368
      %372 = vset.pattern.permute.xlu0 0
      %373 = vperm.xlu0 %372, %v271
      %v374 = vpop.permute.xlu0 %373
      %377 = vset.pattern.permute.xlu0 0
      %378 = vperm.xlu0 %377, %v272
      %v379 = vpop.permute.xlu0 %378
      %382 = vset.pattern.permute.xlu0 0
      %383 = vperm.xlu0 %382, %v273
      %v384 = vpop.permute.xlu0 %383
      %387 = vset.pattern.permute.xlu0 0
      %388 = vperm.xlu0 %387, %v274
      %v389 = vpop.permute.xlu0 %388
      %392 = vset.pattern.permute.xlu0 0
      %393 = vperm.xlu0 %392, %v275
      %v394 = vpop.permute.xlu0 %393
      %397 = vset.pattern.permute.xlu0 0
      %398 = vperm.xlu0 %397, %v276
      %v399 = vpop.permute.xlu0 %398
      %402 = vset.pattern.permute.xlu0 0
      %403 = vperm.xlu0 %402, %v277
      %v404 = vpop.permute.xlu0 %403
      %407 = vset.pattern.permute.xlu0 0
      %408 = vperm.xlu0 %407, %v278
      %v409 = vpop.permute.xlu0 %408
      %412 = vset.pattern.permute.xlu0 0
      %413 = vperm.xlu0 %412, %v279
      %v414 = vpop.permute.xlu0 %413
      %417 = vset.pattern.permute.xlu0 0
      %418 = vperm.xlu0 %417, %v280
      %v419 = vpop.permute.xlu0 %418
      %422 = vset.pattern.permute.xlu0 0
      %423 = vperm.xlu0 %422, %v281
      %v424 = vpop.permute.xlu0 %423
      %427 = vset.pattern.permute.xlu0 0
      %428 = vperm.xlu0 %427, %v282
      %v429 = vpop.permute.xlu0 %428
      %432 = vset.pattern.permute.xlu0 0
      %433 = vperm.xlu0 %432, %v283
      %v434 = vpop.permute.xlu0 %433
      %437 = vset.pattern.permute.xlu0 0
      %438 = vperm.xlu0 %437, %v284
      %v439 = vpop.permute.xlu0 %438
      %442 = vset.pattern.permute.xlu0 0
      %443 = vperm.xlu0 %442, %v285
      %v444 = vpop.permute.xlu0 %443
      %447 = vset.pattern.permute.xlu0 0
      %448 = vperm.xlu0 %447, %v286
      %v449 = vpop.permute.xlu0 %448
      %452 = vset.pattern.permute.xlu0 0
      %453 = vperm.xlu0 %452, %v287
      %v454 = vpop.permute.xlu0 %453
      %v456 = vmul.f32 %v299, %v289
      %v457 = vmul.f32 %v304, %v289
      %v458 = vmul.f32 %v309, %v289
      %v459 = vmul.f32 %v314, %v289
      %v460 = vmul.f32 %v319, %v289
      %v461 = vmul.f32 %v324, %v289
      %v462 = vmul.f32 %v329, %v289
      %v463 = vmul.f32 %v334, %v289
      %v464 = vmul.f32 %v339, %v289
      %v465 = vmul.f32 %v344, %v289
      %v466 = vmul.f32 %v349, %v289
      %v467 = vmul.f32 %v354, %v289
      %v468 = vmul.f32 %v359, %v289
      %v469 = vmul.f32 %v364, %v289
      %v470 = vmul.f32 %v369, %v289
      %v471 = vmul.f32 %v374, %v289
      %v472 = vmul.f32 %v379, %v289
      %v473 = vmul.f32 %v384, %v289
      %v474 = vmul.f32 %v389, %v289
      %v475 = vmul.f32 %v394, %v289
      %v476 = vmul.f32 %v399, %v289
      %v477 = vmul.f32 %v404, %v289
      %v478 = vmul.f32 %v409, %v289
      %v479 = vmul.f32 %v414, %v289
      %v480 = vmul.f32 %v419, %v289
      %v481 = vmul.f32 %v424, %v289
      %v482 = vmul.f32 %v429, %v289
      %v483 = vmul.f32 %v434, %v289
      %v484 = vmul.f32 %v439, %v289
      %v485 = vmul.f32 %v444, %v289
      %v486 = vmul.f32 %v449, %v289
      %v487 = vmul.f32 %v454, %v289
      %488 = vset.pattern.permute.xlu0 1
      %489 = vperm.xlu0 %488, %v256
      %v490 = vpop.permute.xlu0 %489
      %492 = vset.pattern.permute.xlu0 1
      %493 = vperm.xlu0 %492, %v257
      %v494 = vpop.permute.xlu0 %493
      %496 = vset.pattern.permute.xlu0 1
      %497 = vperm.xlu0 %496, %v258
      %v498 = vpop.permute.xlu0 %497
      %500 = vset.pattern.permute.xlu0 1
      %501 = vperm.xlu0 %500, %v259
      %v502 = vpop.permute.xlu0 %501
      %504 = vset.pattern.permute.xlu0 1
      %505 = vperm.xlu0 %504, %v260
      %v506 = vpop.permute.xlu0 %505
      %508 = vset.pattern.permute.xlu0 1
      %509 = vperm.xlu0 %508, %v261
      %v510 = vpop.permute.xlu0 %509
      %512 = vset.pattern.permute.xlu0 1
      %513 = vperm.xlu0 %512, %v262
      %v514 = vpop.permute.xlu0 %513
      %516 = vset.pattern.permute.xlu0 1
      %517 = vperm.xlu0 %516, %v263
      %v518 = vpop.permute.xlu0 %517
      %520 = vset.pattern.permute.xlu0 1
      %521 = vperm.xlu0 %520, %v264
      %v522 = vpop.permute.xlu0 %521
      %524 = vset.pattern.permute.xlu0 1
      %525 = vperm.xlu0 %524, %v265
      %v526 = vpop.permute.xlu0 %525
      %528 = vset.pattern.permute.xlu0 1
      %529 = vperm.xlu0 %528, %v266
      %v530 = vpop.permute.xlu0 %529
      %532 = vset.pattern.permute.xlu0 1
      %533 = vperm.xlu0 %532, %v267
      %v534 = vpop.permute.xlu0 %533
      %536 = vset.pattern.permute.xlu0 1
      %537 = vperm.xlu0 %536, %v268
      %v538 = vpop.permute.xlu0 %537
      %540 = vset.pattern.permute.xlu0 1
      %541 = vperm.xlu0 %540, %v269
      %v542 = vpop.permute.xlu0 %541
      %544 = vset.pattern.permute.xlu0 1
      %545 = vperm.xlu0 %544, %v270
      %v546 = vpop.permute.xlu0 %545
      %548 = vset.pattern.permute.xlu0 1
      %549 = vperm.xlu0 %548, %v271
      %v550 = vpop.permute.xlu0 %549
      %552 = vset.pattern.permute.xlu0 1
      %553 = vperm.xlu0 %552, %v272
      %v554 = vpop.permute.xlu0 %553
      %556 = vset.pattern.permute.xlu0 1
      %557 = vperm.xlu0 %556, %v273
      %v558 = vpop.permute.xlu0 %557
      %560 = vset.pattern.permute.xlu0 1
      %561 = vperm.xlu0 %560, %v274
      %v562 = vpop.permute.xlu0 %561
      %564 = vset.pattern.permute.xlu0 1
      %565 = vperm.xlu0 %564, %v275
      %v566 = vpop.permute.xlu0 %565
      %568 = vset.pattern.permute.xlu0 1
      %569 = vperm.xlu0 %568, %v276
      %v570 = vpop.permute.xlu0 %569
      %572 = vset.pattern.permute.xlu0 1
      %573 = vperm.xlu0 %572, %v277
      %v574 = vpop.permute.xlu0 %573
      %576 = vset.pattern.permute.xlu0 1
      %577 = vperm.xlu0 %576, %v278
      %v578 = vpop.permute.xlu0 %577
      %580 = vset.pattern.permute.xlu0 1
      %581 = vperm.xlu0 %580, %v279
      %v582 = vpop.permute.xlu0 %581
      %584 = vset.pattern.permute.xlu0 1
      %585 = vperm.xlu0 %584, %v280
      %v586 = vpop.permute.xlu0 %585
      %588 = vset.pattern.permute.xlu0 1
      %589 = vperm.xlu0 %588, %v281
      %v590 = vpop.permute.xlu0 %589
      %592 = vset.pattern.permute.xlu0 1
      %593 = vperm.xlu0 %592, %v282
      %v594 = vpop.permute.xlu0 %593
      %596 = vset.pattern.permute.xlu0 1
      %597 = vperm.xlu0 %596, %v283
      %v598 = vpop.permute.xlu0 %597
      %600 = vset.pattern.permute.xlu0 1
      %601 = vperm.xlu0 %600, %v284
      %v602 = vpop.permute.xlu0 %601
      %604 = vset.pattern.permute.xlu0 1
      %605 = vperm.xlu0 %604, %v285
      %v606 = vpop.permute.xlu0 %605
      %608 = vset.pattern.permute.xlu0 1
      %609 = vperm.xlu0 %608, %v286
      %v610 = vpop.permute.xlu0 %609
      %612 = vset.pattern.permute.xlu0 1
      %613 = vperm.xlu0 %612, %v287
      %v614 = vpop.permute.xlu0 %613
      %v616 = vmul.f32 %v490, %v290
      %v617 = vmul.f32 %v494, %v290
      %v618 = vmul.f32 %v498, %v290
      %v619 = vmul.f32 %v502, %v290
      %v620 = vmul.f32 %v506, %v290
      %v621 = vmul.f32 %v510, %v290
      %v622 = vmul.f32 %v514, %v290
      %v623 = vmul.f32 %v518, %v290
      %v624 = vmul.f32 %v522, %v290
      %v625 = vmul.f32 %v526, %v290
      %v626 = vmul.f32 %v530, %v290
      %v627 = vmul.f32 %v534, %v290
      %v628 = vmul.f32 %v538, %v290
      %v629 = vmul.f32 %v542, %v290
      %v630 = vmul.f32 %v546, %v290
      %v631 = vmul.f32 %v550, %v290
      %v632 = vmul.f32 %v554, %v290
      %v633 = vmul.f32 %v558, %v290
      %v634 = vmul.f32 %v562, %v290
      %v635 = vmul.f32 %v566, %v290
      %v636 = vmul.f32 %v570, %v290
      %v637 = vmul.f32 %v574, %v290
      %v638 = vmul.f32 %v578, %v290
      %v639 = vmul.f32 %v582, %v290
      %v640 = vmul.f32 %v586, %v290
      %v641 = vmul.f32 %v590, %v290
      %v642 = vmul.f32 %v594, %v290
      %v643 = vmul.f32 %v598, %v290
      %v644 = vmul.f32 %v602, %v290
      %v645 = vmul.f32 %v606, %v290
      %v646 = vmul.f32 %v610, %v290
      %v647 = vmul.f32 %v614, %v290
      %v648 = vadd.f32 %v456, %v616
      %v649 = vadd.f32 %v457, %v617
      %v650 = vadd.f32 %v458, %v618
      %v651 = vadd.f32 %v459, %v619
      %v652 = vadd.f32 %v460, %v620
      %v653 = vadd.f32 %v461, %v621
      %v654 = vadd.f32 %v462, %v622
      %v655 = vadd.f32 %v463, %v623
      %v656 = vadd.f32 %v464, %v624
      %v657 = vadd.f32 %v465, %v625
      %v658 = vadd.f32 %v466, %v626
      %v659 = vadd.f32 %v467, %v627
      %v660 = vadd.f32 %v468, %v628
      %v661 = vadd.f32 %v469, %v629
      %v662 = vadd.f32 %v470, %v630
      %v663 = vadd.f32 %v471, %v631
      %v664 = vadd.f32 %v472, %v632
      %v665 = vadd.f32 %v473, %v633
      %v666 = vadd.f32 %v474, %v634
      %v667 = vadd.f32 %v475, %v635
      %v668 = vadd.f32 %v476, %v636
      %v669 = vadd.f32 %v477, %v637
      %v670 = vadd.f32 %v478, %v638
      %v671 = vadd.f32 %v479, %v639
      %v672 = vadd.f32 %v480, %v640
      %v673 = vadd.f32 %v481, %v641
      %v674 = vadd.f32 %v482, %v642
      %v675 = vadd.f32 %v483, %v643
      %v676 = vadd.f32 %v484, %v644
      %v677 = vadd.f32 %v485, %v645
      %v678 = vadd.f32 %v486, %v646
      %v679 = vadd.f32 %v487, %v647
      %v680 = vsub.f32 %v288, %v648
      %v681 = vsub.f32 %v288, %v649
      %v682 = vsub.f32 %v288, %v650
      %v683 = vsub.f32 %v288, %v651
      %v684 = vsub.f32 %v288, %v652
      %v685 = vsub.f32 %v288, %v653
      %v686 = vsub.f32 %v288, %v654
      %v687 = vsub.f32 %v288, %v655
      %v688 = vsub.f32 %v288, %v656
      %v689 = vsub.f32 %v288, %v657
      %v690 = vsub.f32 %v288, %v658
      %v691 = vsub.f32 %v288, %v659
      %v692 = vsub.f32 %v288, %v660
      %v693 = vsub.f32 %v288, %v661
      %v694 = vsub.f32 %v288, %v662
      %v695 = vsub.f32 %v288, %v663
      %v696 = vsub.f32 %v288, %v664
      %v697 = vsub.f32 %v288, %v665
      %v698 = vsub.f32 %v288, %v666
      %v699 = vsub.f32 %v288, %v667
      %v700 = vsub.f32 %v288, %v668
      %v701 = vsub.f32 %v288, %v669
      %v702 = vsub.f32 %v288, %v670
      %v703 = vsub.f32 %v288, %v671
      %v704 = vsub.f32 %v288, %v672
      %v705 = vsub.f32 %v288, %v673
      %v706 = vsub.f32 %v288, %v674
      %v707 = vsub.f32 %v288, %v675
      %v708 = vsub.f32 %v288, %v676
      %v709 = vsub.f32 %v288, %v677
      %v710 = vsub.f32 %v288, %v678
      %v711 = vsub.f32 %v288, %v679
      %v712 = vand.u32 2147483647, %v680
      %v713 = vand.u32 2147483647, %v681
      %v714 = vand.u32 2147483647, %v682
      %v715 = vand.u32 2147483647, %v683
      %v716 = vand.u32 2147483647, %v684
      %v717 = vand.u32 2147483647, %v685
      %v718 = vand.u32 2147483647, %v686
      %v719 = vand.u32 2147483647, %v687
      %v720 = vand.u32 2147483647, %v688
      %v721 = vand.u32 2147483647, %v689
      %v722 = vand.u32 2147483647, %v690
      %v723 = vand.u32 2147483647, %v691
      %v724 = vand.u32 2147483647, %v692
      %v725 = vand.u32 2147483647, %v693
      %v726 = vand.u32 2147483647, %v694
      %v727 = vand.u32 2147483647, %v695
      %v728 = vand.u32 2147483647, %v696
      %v729 = vand.u32 2147483647, %v697
      %v730 = vand.u32 2147483647, %v698
      %v731 = vand.u32 2147483647, %v699
      %v732 = vand.u32 2147483647, %v700
      %v733 = vand.u32 2147483647, %v701
      %v734 = vand.u32 2147483647, %v702
      %v735 = vand.u32 2147483647, %v703
      %v736 = vand.u32 2147483647, %v704
      %v737 = vand.u32 2147483647, %v705
      %v738 = vand.u32 2147483647, %v706
      %v739 = vand.u32 2147483647, %v707
      %v740 = vand.u32 2147483647, %v708
      %v741 = vand.u32 2147483647, %v709
      %v742 = vand.u32 2147483647, %v710
      %v743 = vand.u32 2147483647, %v711
      %v744 = vpack.c.bf16 %v713, %v712
      %v745 = vpack.c.bf16 %v715, %v714
      %v746 = vpack.c.bf16 %v717, %v716
      %v747 = vpack.c.bf16 %v719, %v718
      %v748 = vpack.c.bf16 %v721, %v720
      %v749 = vpack.c.bf16 %v723, %v722
      %v750 = vpack.c.bf16 %v725, %v724
      %v751 = vpack.c.bf16 %v727, %v726
      %v752 = vpack.c.bf16 %v729, %v728
      %v753 = vpack.c.bf16 %v731, %v730
      %v754 = vpack.c.bf16 %v733, %v732
      %v755 = vpack.c.bf16 %v735, %v734
      %v756 = vpack.c.bf16 %v737, %v736
      %v757 = vpack.c.bf16 %v739, %v738
      %v758 = vpack.c.bf16 %v741, %v740
      %v759 = vpack.c.bf16 %v743, %v742
      %v760 = vld [vmem:[%s2] sm:$0xf]
      %v761 = vld [vmem:[%s2 + $0x4] sm:$0xf]
      %v762 = vld [vmem:[%s2 + $0x8] sm:$0xf]
      %v763 = vld [vmem:[%s2 + $0xc] sm:$0xf]
      %v764 = vld [vmem:[%s2 + $0x10] sm:$0xf]
      %v765 = vld [vmem:[%s2 + $0x14] sm:$0xf]
      %v766 = vld [vmem:[%s2 + $0x18] sm:$0xf]
      %v767 = vld [vmem:[%s2 + $0x1c] sm:$0xf]
      %v776 = vunpack.c.l.b16 %v760
      %v777 = vunpack.c.l.b16 %v761
      %v778 = vunpack.c.l.b16 %v762
      %v779 = vunpack.c.l.b16 %v763
      %v780 = vunpack.c.l.b16 %v764
      %v781 = vunpack.c.l.b16 %v765
      %v782 = vunpack.c.l.b16 %v766
      %v783 = vunpack.c.l.b16 %v767
      %v784 = vpack.c.b16 %v777, %v776
      %v785 = vpack.c.b16 %v779, %v778
      %v786 = vpack.c.b16 %v781, %v780
      %v787 = vpack.c.b16 %v783, %v782
      %vm792 = vcmask 523264
      %v794 = vsel %vm792, %v744, 0
      %v797 = vsel %vm792, %v745, 0
      %v800 = vsel %vm792, %v746, 0
      %v803 = vsel %vm792, %v747, 0
      %v806 = vsel %vm792, %v748, 0
      %v809 = vsel %vm792, %v749, 0
      %v812 = vsel %vm792, %v750, 0
      %v815 = vsel %vm792, %v751, 0
      %v818 = vsel %vm792, %v752, 0
      %v821 = vsel %vm792, %v753, 0
      %v824 = vsel %vm792, %v754, 0
      %v827 = vsel %vm792, %v755, 0
      %v830 = vsel %vm792, %v756, 0
      %v833 = vsel %vm792, %v757, 0
      %v836 = vsel %vm792, %v758, 0
      %v839 = vsel %vm792, %v759, 0
      %841 = vmatpush.bf16.msra.mxu0 0
      %842 = vmatpush.bf16.msra.mxu0 0
      %843 = vmatpush.bf16.msra.mxu0 0
      %844 = vmatpush.bf16.msra.mxu0 0
      %845 = vmatpush.bf16.msra.mxu0 %v787
      %846 = vmatpush.bf16.msra.mxu0 %v786
      %847 = vmatpush.bf16.msra.mxu0 %v785
      %848 = vmatpush.bf16.msra.mxu0 %v784
      %849 = vmatmul.bf16.gmra.mxu0 %v794
      %v850 = vpop.f32.mrf.mxu0
      %v851 = vadd.f32 %v291, %v850
      %v852 = vpop.f32.mrf.mxu0
      %v853 = vadd.f32 %v291, %v852
      %854 = vmatmul.bf16.gmra.mxu0 %v797
      %v855 = vpop.f32.mrf.mxu0
      %v856 = vadd.f32 %v291, %v855
      %v857 = vpop.f32.mrf.mxu0
      %v858 = vadd.f32 %v291, %v857
      %859 = vmatmul.bf16.gmra.mxu0 %v800
      %v860 = vpop.f32.mrf.mxu0
      %v861 = vadd.f32 %v291, %v860
      %v862 = vpop.f32.mrf.mxu0
      %v863 = vadd.f32 %v291, %v862
      %864 = vmatmul.bf16.gmra.mxu0 %v803
      %v865 = vpop.f32.mrf.mxu0
      %v866 = vadd.f32 %v291, %v865
      %v867 = vpop.f32.mrf.mxu0
      %v868 = vadd.f32 %v291, %v867
      %869 = vmatmul.bf16.gmra.mxu0 %v806
      %v870 = vpop.f32.mrf.mxu0
      %v871 = vadd.f32 %v291, %v870
      %v872 = vpop.f32.mrf.mxu0
      %v873 = vadd.f32 %v291, %v872
      %874 = vmatmul.bf16.gmra.mxu0 %v809
      %v875 = vpop.f32.mrf.mxu0
      %v876 = vadd.f32 %v291, %v875
      %v877 = vpop.f32.mrf.mxu0
      %v878 = vadd.f32 %v291, %v877
      %879 = vmatmul.bf16.gmra.mxu0 %v812
      %v880 = vpop.f32.mrf.mxu0
      %v881 = vadd.f32 %v291, %v880
      %v882 = vpop.f32.mrf.mxu0
      %v883 = vadd.f32 %v291, %v882
      %884 = vmatmul.bf16.gmra.mxu0 %v815
      %v885 = vpop.f32.mrf.mxu0
      %v886 = vadd.f32 %v291, %v885
      %v887 = vpop.f32.mrf.mxu0
      %v888 = vadd.f32 %v291, %v887
      %889 = vmatmul.bf16.gmra.mxu0 %v818
      %v890 = vpop.f32.mrf.mxu0
      %v891 = vadd.f32 %v291, %v890
      %v892 = vpop.f32.mrf.mxu0
      %v893 = vadd.f32 %v291, %v892
      %894 = vmatmul.bf16.gmra.mxu0 %v821
      %v895 = vpop.f32.mrf.mxu0
      %v896 = vadd.f32 %v291, %v895
      %v897 = vpop.f32.mrf.mxu0
      %v898 = vadd.f32 %v291, %v897
      %899 = vmatmul.bf16.gmra.mxu0 %v824
      %v900 = vpop.f32.mrf.mxu0
      %v901 = vadd.f32 %v291, %v900
      %v902 = vpop.f32.mrf.mxu0
      %v903 = vadd.f32 %v291, %v902
      %904 = vmatmul.bf16.gmra.mxu0 %v827
      %v905 = vpop.f32.mrf.mxu0
      %v906 = vadd.f32 %v291, %v905
      %v907 = vpop.f32.mrf.mxu0
      %v908 = vadd.f32 %v291, %v907
      %909 = vmatmul.bf16.gmra.mxu0 %v830
      %v910 = vpop.f32.mrf.mxu0
      %v911 = vadd.f32 %v291, %v910
      %v912 = vpop.f32.mrf.mxu0
      %v913 = vadd.f32 %v291, %v912
      %914 = vmatmul.bf16.gmra.mxu0 %v833
      %v915 = vpop.f32.mrf.mxu0
      %v916 = vadd.f32 %v291, %v915
      %v917 = vpop.f32.mrf.mxu0
      %v918 = vadd.f32 %v291, %v917
      %919 = vmatmul.bf16.gmra.mxu0 %v836
      %v920 = vpop.f32.mrf.mxu0
      %v921 = vadd.f32 %v291, %v920
      %v922 = vpop.f32.mrf.mxu0
      %v923 = vadd.f32 %v291, %v922
      %924 = vmatmul.bf16.gmra.mxu0 %v839
      %v925 = vpop.f32.mrf.mxu0
      %v926 = vadd.f32 %v291, %v925
      %v927 = vpop.f32.mrf.mxu0
      %v928 = vadd.f32 %v291, %v927
      %929 = vdwg.mxu0
      %v930 = vmax.f32 %v851, 0.0
      %v931 = vmax.f32 %v853, 0.0
      %v932 = vmax.f32 %v856, 0.0
      %v933 = vmax.f32 %v858, 0.0
      %v934 = vmax.f32 %v861, 0.0
      %v935 = vmax.f32 %v863, 0.0
      %v936 = vmax.f32 %v866, 0.0
      %v937 = vmax.f32 %v868, 0.0
      %v938 = vmax.f32 %v871, 0.0
      %v939 = vmax.f32 %v873, 0.0
      %v940 = vmax.f32 %v876, 0.0
      %v941 = vmax.f32 %v878, 0.0
      %v942 = vmax.f32 %v881, 0.0
      %v943 = vmax.f32 %v883, 0.0
      %v944 = vmax.f32 %v886, 0.0
      %v945 = vmax.f32 %v888, 0.0
      %v946 = vmax.f32 %v891, 0.0
      %v947 = vmax.f32 %v893, 0.0
      %v948 = vmax.f32 %v896, 0.0
      %v949 = vmax.f32 %v898, 0.0
      %v950 = vmax.f32 %v901, 0.0
      %v951 = vmax.f32 %v903, 0.0
      %v952 = vmax.f32 %v906, 0.0
      %v953 = vmax.f32 %v908, 0.0
      %v954 = vmax.f32 %v911, 0.0
      %v955 = vmax.f32 %v913, 0.0
      %v956 = vmax.f32 %v916, 0.0
      %v957 = vmax.f32 %v918, 0.0
      %v958 = vmax.f32 %v921, 0.0
      %v959 = vmax.f32 %v923, 0.0
      %v960 = vmax.f32 %v926, 0.0
      %v961 = vmax.f32 %v928, 0.0
      %v962 = vpack.c.bf16 %v931, %v930
      %v963 = vpack.c.bf16 %v933, %v932
      %v964 = vpack.c.bf16 %v935, %v934
      %v965 = vpack.c.bf16 %v937, %v936
      %v966 = vpack.c.bf16 %v939, %v938
      %v967 = vpack.c.bf16 %v941, %v940
      %v968 = vpack.c.bf16 %v943, %v942
      %v969 = vpack.c.bf16 %v945, %v944
      %v970 = vpack.c.bf16 %v947, %v946
      %v971 = vpack.c.bf16 %v949, %v948
      %v972 = vpack.c.bf16 %v951, %v950
      %v973 = vpack.c.bf16 %v953, %v952
      %v974 = vpack.c.bf16 %v955, %v954
      %v975 = vpack.c.bf16 %v957, %v956
      %v976 = vpack.c.bf16 %v959, %v958
      %v977 = vpack.c.bf16 %v961, %v960
      %v978 = vld [vmem:[%s3] sm:$0xf]
      %v979 = vld [vmem:[%s3 + $0x4] sm:$0xf]
      %v980 = vld [vmem:[%s3 + $0x8] sm:$0xf]
      %v981 = vld [vmem:[%s3 + $0xc] sm:$0xf]
      %v982 = vld [vmem:[%s3 + $0x10] sm:$0xf]
      %v983 = vld [vmem:[%s3 + $0x14] sm:$0xf]
      %v984 = vld [vmem:[%s3 + $0x18] sm:$0xf]
      %v985 = vld [vmem:[%s3 + $0x1c] sm:$0xf]
      %v994 = vunpack.c.l.b16 %v978
      %v995 = vunpack.c.l.b16 %v979
      %v996 = vunpack.c.l.b16 %v980
      %v997 = vunpack.c.l.b16 %v981
      %v998 = vunpack.c.l.b16 %v982
      %v999 = vunpack.c.l.b16 %v983
      %v1000 = vunpack.c.l.b16 %v984
      %v1001 = vunpack.c.l.b16 %v985
      %v1002 = vpack.c.b16 %v995, %v994
      %v1003 = vpack.c.b16 %v997, %v996
      %v1004 = vpack.c.b16 %v999, %v998
      %v1005 = vpack.c.b16 %v1001, %v1000
      %v1011 = vsel %vm792, %v962, 0
      %v1014 = vsel %vm792, %v963, 0
      %v1017 = vsel %vm792, %v964, 0
      %v1020 = vsel %vm792, %v965, 0
      %v1023 = vsel %vm792, %v966, 0
      %v1026 = vsel %vm792, %v967, 0
      %v1029 = vsel %vm792, %v968, 0
      %v1032 = vsel %vm792, %v969, 0
      %v1035 = vsel %vm792, %v970, 0
      %v1038 = vsel %vm792, %v971, 0
      %v1041 = vsel %vm792, %v972, 0
      %v1044 = vsel %vm792, %v973, 0
      %v1047 = vsel %vm792, %v974, 0
      %v1050 = vsel %vm792, %v975, 0
      %v1053 = vsel %vm792, %v976, 0
      %v1056 = vsel %vm792, %v977, 0
      %1058 = vmatpush.bf16.msra.mxu0 0
      %1059 = vmatpush.bf16.msra.mxu0 0
      %1060 = vmatpush.bf16.msra.mxu0 0
      %1061 = vmatpush.bf16.msra.mxu0 0
      %1062 = vmatpush.bf16.msra.mxu0 %v1005
      %1063 = vmatpush.bf16.msra.mxu0 %v1004
      %1064 = vmatpush.bf16.msra.mxu0 %v1003
      %1065 = vmatpush.bf16.msra.mxu0 %v1002
      %1066 = vmatmul.bf16.gmra.mxu0 %v1011
      %v1067 = vpop.f32.mrf.mxu0
      %v1068 = vadd.f32 %v292, %v1067
      %v1069 = vpop.f32.mrf.mxu0
      %v1070 = vadd.f32 %v292, %v1069
      %1071 = vmatmul.bf16.gmra.mxu0 %v1014
      %v1072 = vpop.f32.mrf.mxu0
      %v1073 = vadd.f32 %v292, %v1072
      %v1074 = vpop.f32.mrf.mxu0
      %v1075 = vadd.f32 %v292, %v1074
      %1076 = vmatmul.bf16.gmra.mxu0 %v1017
      %v1077 = vpop.f32.mrf.mxu0
      %v1078 = vadd.f32 %v292, %v1077
      %v1079 = vpop.f32.mrf.mxu0
      %v1080 = vadd.f32 %v292, %v1079
      %1081 = vmatmul.bf16.gmra.mxu0 %v1020
      %v1082 = vpop.f32.mrf.mxu0
      %v1083 = vadd.f32 %v292, %v1082
      %v1084 = vpop.f32.mrf.mxu0
      %v1085 = vadd.f32 %v292, %v1084
      %1086 = vmatmul.bf16.gmra.mxu0 %v1023
      %v1087 = vpop.f32.mrf.mxu0
      %v1088 = vadd.f32 %v292, %v1087
      %v1089 = vpop.f32.mrf.mxu0
      %v1090 = vadd.f32 %v292, %v1089
      %1091 = vmatmul.bf16.gmra.mxu0 %v1026
      %v1092 = vpop.f32.mrf.mxu0
      %v1093 = vadd.f32 %v292, %v1092
      %v1094 = vpop.f32.mrf.mxu0
      %v1095 = vadd.f32 %v292, %v1094
      %1096 = vmatmul.bf16.gmra.mxu0 %v1029
      %v1097 = vpop.f32.mrf.mxu0
      %v1098 = vadd.f32 %v292, %v1097
      %v1099 = vpop.f32.mrf.mxu0
      %v1100 = vadd.f32 %v292, %v1099
      %1101 = vmatmul.bf16.gmra.mxu0 %v1032
      %v1102 = vpop.f32.mrf.mxu0
      %v1103 = vadd.f32 %v292, %v1102
      %v1104 = vpop.f32.mrf.mxu0
      %v1105 = vadd.f32 %v292, %v1104
      %1106 = vmatmul.bf16.gmra.mxu0 %v1035
      %v1107 = vpop.f32.mrf.mxu0
      %v1108 = vadd.f32 %v292, %v1107
      %v1109 = vpop.f32.mrf.mxu0
      %v1110 = vadd.f32 %v292, %v1109
      %1111 = vmatmul.bf16.gmra.mxu0 %v1038
      %v1112 = vpop.f32.mrf.mxu0
      %v1113 = vadd.f32 %v292, %v1112
      %v1114 = vpop.f32.mrf.mxu0
      %v1115 = vadd.f32 %v292, %v1114
      %1116 = vmatmul.bf16.gmra.mxu0 %v1041
      %v1117 = vpop.f32.mrf.mxu0
      %v1118 = vadd.f32 %v292, %v1117
      %v1119 = vpop.f32.mrf.mxu0
      %v1120 = vadd.f32 %v292, %v1119
      %1121 = vmatmul.bf16.gmra.mxu0 %v1044
      %v1122 = vpop.f32.mrf.mxu0
      %v1123 = vadd.f32 %v292, %v1122
      %v1124 = vpop.f32.mrf.mxu0
      %v1125 = vadd.f32 %v292, %v1124
      %1126 = vmatmul.bf16.gmra.mxu0 %v1047
      %v1127 = vpop.f32.mrf.mxu0
      %v1128 = vadd.f32 %v292, %v1127
      %v1129 = vpop.f32.mrf.mxu0
      %v1130 = vadd.f32 %v292, %v1129
      %1131 = vmatmul.bf16.gmra.mxu0 %v1050
      %v1132 = vpop.f32.mrf.mxu0
      %v1133 = vadd.f32 %v292, %v1132
      %v1134 = vpop.f32.mrf.mxu0
      %v1135 = vadd.f32 %v292, %v1134
      %1136 = vmatmul.bf16.gmra.mxu0 %v1053
      %v1137 = vpop.f32.mrf.mxu0
      %v1138 = vadd.f32 %v292, %v1137
      %v1139 = vpop.f32.mrf.mxu0
      %v1140 = vadd.f32 %v292, %v1139
      %1141 = vmatmul.bf16.gmra.mxu0 %v1056
      %v1142 = vpop.f32.mrf.mxu0
      %v1143 = vadd.f32 %v292, %v1142
      %v1144 = vpop.f32.mrf.mxu0
      %v1145 = vadd.f32 %v292, %v1144
      %1146 = vdwg.mxu0
      %v1147 = vmax.f32 %v1068, 0.0
      %v1148 = vmax.f32 %v1070, 0.0
      %v1149 = vmax.f32 %v1073, 0.0
      %v1150 = vmax.f32 %v1075, 0.0
      %v1151 = vmax.f32 %v1078, 0.0
      %v1152 = vmax.f32 %v1080, 0.0
      %v1153 = vmax.f32 %v1083, 0.0
      %v1154 = vmax.f32 %v1085, 0.0
      %v1155 = vmax.f32 %v1088, 0.0
      %v1156 = vmax.f32 %v1090, 0.0
      %v1157 = vmax.f32 %v1093, 0.0
      %v1158 = vmax.f32 %v1095, 0.0
      %v1159 = vmax.f32 %v1098, 0.0
      %v1160 = vmax.f32 %v1100, 0.0
      %v1161 = vmax.f32 %v1103, 0.0
      %v1162 = vmax.f32 %v1105, 0.0
      %v1163 = vmax.f32 %v1108, 0.0
      %v1164 = vmax.f32 %v1110, 0.0
      %v1165 = vmax.f32 %v1113, 0.0
      %v1166 = vmax.f32 %v1115, 0.0
      %v1167 = vmax.f32 %v1118, 0.0
      %v1168 = vmax.f32 %v1120, 0.0
      %v1169 = vmax.f32 %v1123, 0.0
      %v1170 = vmax.f32 %v1125, 0.0
      %v1171 = vmax.f32 %v1128, 0.0
      %v1172 = vmax.f32 %v1130, 0.0
      %v1173 = vmax.f32 %v1133, 0.0
      %v1174 = vmax.f32 %v1135, 0.0
      %v1175 = vmax.f32 %v1138, 0.0
      %v1176 = vmax.f32 %v1140, 0.0
      %v1177 = vmax.f32 %v1143, 0.0
      %v1178 = vmax.f32 %v1145, 0.0
      %v1179 = vpack.c.bf16 %v1148, %v1147
      %v1180 = vpack.c.bf16 %v1150, %v1149
      %v1181 = vpack.c.bf16 %v1152, %v1151
      %v1182 = vpack.c.bf16 %v1154, %v1153
      %v1183 = vpack.c.bf16 %v1156, %v1155
      %v1184 = vpack.c.bf16 %v1158, %v1157
      %v1185 = vpack.c.bf16 %v1160, %v1159
      %v1186 = vpack.c.bf16 %v1162, %v1161
      %v1187 = vpack.c.bf16 %v1164, %v1163
      %v1188 = vpack.c.bf16 %v1166, %v1165
      %v1189 = vpack.c.bf16 %v1168, %v1167
      %v1190 = vpack.c.bf16 %v1170, %v1169
      %v1191 = vpack.c.bf16 %v1172, %v1171
      %v1192 = vpack.c.bf16 %v1174, %v1173
      %v1193 = vpack.c.bf16 %v1176, %v1175
      %v1194 = vpack.c.bf16 %v1178, %v1177
      %v1195 = vld [vmem:[%s4] sm:$0xff]
      %v1196 = vld [vmem:[%s4 + $0x8] sm:$0xff]
      %v1197 = vld [vmem:[%s4 + $0x10] sm:$0xff]
      %v1198 = vld [vmem:[%s4 + $0x18] sm:$0xff]
      %v1199 = vld [vmem:[%s4 + $0x20] sm:$0xff]
      %v1200 = vld [vmem:[%s4 + $0x28] sm:$0xff]
      %v1201 = vld [vmem:[%s4 + $0x30] sm:$0xff]
      %v1202 = vld [vmem:[%s4 + $0x38] sm:$0xff]
      %v1203 = vld [vmem:[%s4 + $0x40] sm:$0xff]
      %v1204 = vld [vmem:[%s4 + $0x48] sm:$0xff]
      %v1205 = vld [vmem:[%s4 + $0x50] sm:$0xff]
      %v1206 = vld [vmem:[%s4 + $0x58] sm:$0xff]
      %v1207 = vld [vmem:[%s4 + $0x60] sm:$0xff]
      %v1208 = vld [vmem:[%s4 + $0x68] sm:$0xff]
      %v1209 = vld [vmem:[%s4 + $0x70] sm:$0xff]
      %v1210 = vld [vmem:[%s4 + $0x78] sm:$0xff]
      %v1211 = vld [vmem:[%s4 + $0x80] sm:$0xff]
      %v1212 = vld [vmem:[%s4 + $0x88] sm:$0xff]
      %v1213 = vld [vmem:[%s4 + $0x90] sm:$0xff]
      %v1214 = vld [vmem:[%s4 + $0x98] sm:$0xff]
      %v1215 = vld [vmem:[%s4 + $0xa0] sm:$0xff]
      %v1216 = vld [vmem:[%s4 + $0xa8] sm:$0xff]
      %v1217 = vld [vmem:[%s4 + $0xb0] sm:$0xff]
      %v1218 = vld [vmem:[%s4 + $0xb8] sm:$0xff]
      %v1219 = vld [vmem:[%s4 + $0xc0] sm:$0xff]
      %v1220 = vld [vmem:[%s4 + $0xc8] sm:$0xff]
      %v1221 = vld [vmem:[%s4 + $0xd0] sm:$0xff]
      %v1222 = vld [vmem:[%s4 + $0xd8] sm:$0xff]
      %v1223 = vld [vmem:[%s4 + $0xe0] sm:$0xff]
      %v1224 = vld [vmem:[%s4 + $0xe8] sm:$0xff]
      %v1225 = vld [vmem:[%s4 + $0xf0] sm:$0xff]
      %v1226 = vld [vmem:[%s4 + $0xf8] sm:$0xff]
      %v1228 = vperm.slane %v294, 0
      %v1229 = vperm.slane %v294, 1
      %v1230 = vperm.slane %v294, 2
      %v1231 = vperm.slane %v294, 3
      %v1268 = vunpack.c.l.b16 %v1195
      %v1269 = vunpack.c.h.b16 %v1195
      %v1270 = vunpack.c.l.b16 %v1196
      %v1271 = vunpack.c.h.b16 %v1196
      %v1272 = vunpack.c.l.b16 %v1197
      %v1273 = vunpack.c.h.b16 %v1197
      %v1274 = vunpack.c.l.b16 %v1198
      %v1275 = vunpack.c.h.b16 %v1198
      %v1276 = vunpack.c.l.b16 %v1199
      %v1277 = vunpack.c.h.b16 %v1199
      %v1278 = vunpack.c.l.b16 %v1200
      %v1279 = vunpack.c.h.b16 %v1200
      %v1280 = vunpack.c.l.b16 %v1201
      %v1281 = vunpack.c.h.b16 %v1201
      %v1282 = vunpack.c.l.b16 %v1202
      %v1283 = vunpack.c.h.b16 %v1202
      %v1284 = vunpack.c.l.b16 %v1203
      %v1285 = vunpack.c.h.b16 %v1203
      %v1286 = vunpack.c.l.b16 %v1204
      %v1287 = vunpack.c.h.b16 %v1204
      %v1288 = vunpack.c.l.b16 %v1205
      %v1289 = vunpack.c.h.b16 %v1205
      %v1290 = vunpack.c.l.b16 %v1206
      %v1291 = vunpack.c.h.b16 %v1206
      %v1292 = vunpack.c.l.b16 %v1207
      %v1293 = vunpack.c.h.b16 %v1207
      %v1294 = vunpack.c.l.b16 %v1208
      %v1295 = vunpack.c.h.b16 %v1208
      %v1296 = vunpack.c.l.b16 %v1209
      %v1297 = vunpack.c.h.b16 %v1209
      %v1298 = vunpack.c.l.b16 %v1210
      %v1299 = vunpack.c.h.b16 %v1210
      %v1300 = vunpack.c.l.b16 %v1211
      %v1301 = vunpack.c.h.b16 %v1211
      %v1302 = vunpack.c.l.b16 %v1212
      %v1303 = vunpack.c.h.b16 %v1212
      %v1304 = vunpack.c.l.b16 %v1213
      %v1305 = vunpack.c.h.b16 %v1213
      %v1306 = vunpack.c.l.b16 %v1214
      %v1307 = vunpack.c.h.b16 %v1214
      %v1308 = vunpack.c.l.b16 %v1215
      %v1309 = vunpack.c.h.b16 %v1215
      %v1310 = vunpack.c.l.b16 %v1216
      %v1311 = vunpack.c.h.b16 %v1216
      %v1312 = vunpack.c.l.b16 %v1217
      %v1313 = vunpack.c.h.b16 %v1217
      %v1314 = vunpack.c.l.b16 %v1218
      %v1315 = vunpack.c.h.b16 %v1218
      %v1316 = vunpack.c.l.b16 %v1219
      %v1317 = vunpack.c.h.b16 %v1219
      %v1318 = vunpack.c.l.b16 %v1220
      %v1319 = vunpack.c.h.b16 %v1220
      %v1320 = vunpack.c.l.b16 %v1221
      %v1321 = vunpack.c.h.b16 %v1221
      %v1322 = vunpack.c.l.b16 %v1222
      %v1323 = vunpack.c.h.b16 %v1222
      %v1324 = vunpack.c.l.b16 %v1223
      %v1325 = vunpack.c.h.b16 %v1223
      %v1326 = vunpack.c.l.b16 %v1224
      %v1327 = vunpack.c.h.b16 %v1224
      %v1328 = vunpack.c.l.b16 %v1225
      %v1329 = vunpack.c.h.b16 %v1225
      %v1330 = vunpack.c.l.b16 %v1226
      %v1331 = vunpack.c.h.b16 %v1226
      %v1332 = vpack.c.b16 %v1272, %v1268
      %v1333 = vpack.c.b16 %v1273, %v1269
      %v1334 = vpack.c.b16 %v1274, %v1270
      %v1335 = vpack.c.b16 %v1275, %v1271
      %v1336 = vpack.c.b16 %v1280, %v1276
      %v1337 = vpack.c.b16 %v1281, %v1277
      %v1338 = vpack.c.b16 %v1282, %v1278
      %v1339 = vpack.c.b16 %v1283, %v1279
      %v1340 = vpack.c.b16 %v1288, %v1284
      %v1341 = vpack.c.b16 %v1289, %v1285
      %v1342 = vpack.c.b16 %v1290, %v1286
      %v1343 = vpack.c.b16 %v1291, %v1287
      %v1344 = vpack.c.b16 %v1296, %v1292
      %v1345 = vpack.c.b16 %v1297, %v1293
      %v1346 = vpack.c.b16 %v1298, %v1294
      %v1347 = vpack.c.b16 %v1299, %v1295
      %v1348 = vpack.c.b16 %v1304, %v1300
      %v1349 = vpack.c.b16 %v1305, %v1301
      %v1350 = vpack.c.b16 %v1306, %v1302
      %v1351 = vpack.c.b16 %v1307, %v1303
      %v1352 = vpack.c.b16 %v1312, %v1308
      %v1353 = vpack.c.b16 %v1313, %v1309
      %v1354 = vpack.c.b16 %v1314, %v1310
      %v1355 = vpack.c.b16 %v1315, %v1311
      %v1356 = vpack.c.b16 %v1320, %v1316
      %v1357 = vpack.c.b16 %v1321, %v1317
      %v1358 = vpack.c.b16 %v1322, %v1318
      %v1359 = vpack.c.b16 %v1323, %v1319
      %v1360 = vpack.c.b16 %v1328, %v1324
      %v1361 = vpack.c.b16 %v1329, %v1325
      %v1362 = vpack.c.b16 %v1330, %v1326
      %v1363 = vpack.c.b16 %v1331, %v1327
      %1396 = vmatpush.bf16.msra.mxu0 %v1360
      %1397 = vmatpush.bf16.msra.mxu0 %v1356
      %1398 = vmatpush.bf16.msra.mxu0 %v1352
      %1399 = vmatpush.bf16.msra.mxu0 %v1348
      %1400 = vmatpush.bf16.msra.mxu0 %v1344
      %1401 = vmatpush.bf16.msra.mxu0 %v1340
      %1402 = vmatpush.bf16.msra.mxu0 %v1336
      %1403 = vmatpush.bf16.msra.mxu0 %v1332
      %1404 = vmatmul.bf16.gmra.mxu0 %v1179
      %v1405 = vpop.f32.mrf.mxu0
      %v1406 = vadd.f32 %v1228, %v1405
      %v1407 = vpop.f32.mrf.mxu0
      %v1408 = vadd.f32 %v1228, %v1407
      %1409 = vmatmul.bf16.gmra.mxu0 %v1180
      %v1410 = vpop.f32.mrf.mxu0
      %v1411 = vadd.f32 %v1228, %v1410
      %v1412 = vpop.f32.mrf.mxu0
      %v1413 = vadd.f32 %v1228, %v1412
      %1414 = vmatmul.bf16.gmra.mxu0 %v1181
      %v1415 = vpop.f32.mrf.mxu0
      %v1416 = vadd.f32 %v1228, %v1415
      %v1417 = vpop.f32.mrf.mxu0
      %v1418 = vadd.f32 %v1228, %v1417
      %1419 = vmatmul.bf16.gmra.mxu0 %v1182
      %v1420 = vpop.f32.mrf.mxu0
      %v1421 = vadd.f32 %v1228, %v1420
      %v1422 = vpop.f32.mrf.mxu0
      %v1423 = vadd.f32 %v1228, %v1422
      %1424 = vmatmul.bf16.gmra.mxu0 %v1183
      %v1425 = vpop.f32.mrf.mxu0
      %v1426 = vadd.f32 %v1228, %v1425
      %v1427 = vpop.f32.mrf.mxu0
      %v1428 = vadd.f32 %v1228, %v1427
      %1429 = vmatmul.bf16.gmra.mxu0 %v1184
      %v1430 = vpop.f32.mrf.mxu0
      %v1431 = vadd.f32 %v1228, %v1430
      %v1432 = vpop.f32.mrf.mxu0
      %v1433 = vadd.f32 %v1228, %v1432
      %1434 = vmatmul.bf16.gmra.mxu0 %v1185
      %v1435 = vpop.f32.mrf.mxu0
      %v1436 = vadd.f32 %v1228, %v1435
      %v1437 = vpop.f32.mrf.mxu0
      %v1438 = vadd.f32 %v1228, %v1437
      %1439 = vmatmul.bf16.gmra.mxu0 %v1186
      %v1440 = vpop.f32.mrf.mxu0
      %v1441 = vadd.f32 %v1228, %v1440
      %v1442 = vpop.f32.mrf.mxu0
      %v1443 = vadd.f32 %v1228, %v1442
      %1444 = vmatmul.bf16.gmra.mxu0 %v1187
      %v1445 = vpop.f32.mrf.mxu0
      %v1446 = vadd.f32 %v1228, %v1445
      %v1447 = vpop.f32.mrf.mxu0
      %v1448 = vadd.f32 %v1228, %v1447
      %1449 = vmatmul.bf16.gmra.mxu0 %v1188
      %v1450 = vpop.f32.mrf.mxu0
      %v1451 = vadd.f32 %v1228, %v1450
      %v1452 = vpop.f32.mrf.mxu0
      %v1453 = vadd.f32 %v1228, %v1452
      %1454 = vmatmul.bf16.gmra.mxu0 %v1189
      %v1455 = vpop.f32.mrf.mxu0
      %v1456 = vadd.f32 %v1228, %v1455
      %v1457 = vpop.f32.mrf.mxu0
      %v1458 = vadd.f32 %v1228, %v1457
      %1459 = vmatmul.bf16.gmra.mxu0 %v1190
      %v1460 = vpop.f32.mrf.mxu0
      %v1461 = vadd.f32 %v1228, %v1460
      %v1462 = vpop.f32.mrf.mxu0
      %v1463 = vadd.f32 %v1228, %v1462
      %1464 = vmatmul.bf16.gmra.mxu0 %v1191
      %v1465 = vpop.f32.mrf.mxu0
      %v1466 = vadd.f32 %v1228, %v1465
      %v1467 = vpop.f32.mrf.mxu0
      %v1468 = vadd.f32 %v1228, %v1467
      %1469 = vmatmul.bf16.gmra.mxu0 %v1192
      %v1470 = vpop.f32.mrf.mxu0
      %v1471 = vadd.f32 %v1228, %v1470
      %v1472 = vpop.f32.mrf.mxu0
      %v1473 = vadd.f32 %v1228, %v1472
      %1474 = vmatmul.bf16.gmra.mxu0 %v1193
      %v1475 = vpop.f32.mrf.mxu0
      %v1476 = vadd.f32 %v1228, %v1475
      %v1477 = vpop.f32.mrf.mxu0
      %v1478 = vadd.f32 %v1228, %v1477
      %1479 = vmatmul.bf16.gmra.mxu0 %v1194
      %v1480 = vpop.f32.mrf.mxu0
      %v1481 = vadd.f32 %v1228, %v1480
      %v1482 = vpop.f32.mrf.mxu0
      %v1483 = vadd.f32 %v1228, %v1482
      %1484 = vdwg.mxu0
      %1485 = vmatpush.bf16.msra.mxu0 %v1361
      %1486 = vmatpush.bf16.msra.mxu0 %v1357
      %1487 = vmatpush.bf16.msra.mxu0 %v1353
      %1488 = vmatpush.bf16.msra.mxu0 %v1349
      %1489 = vmatpush.bf16.msra.mxu0 %v1345
      %1490 = vmatpush.bf16.msra.mxu0 %v1341
      %1491 = vmatpush.bf16.msra.mxu0 %v1337
      %1492 = vmatpush.bf16.msra.mxu0 %v1333
      %1493 = vmatmul.bf16.gmra.mxu0 %v1179
      %v1494 = vpop.f32.mrf.mxu0
      %v1495 = vadd.f32 %v1229, %v1494
      %v1496 = vpop.f32.mrf.mxu0
      %v1497 = vadd.f32 %v1229, %v1496
      %1498 = vmatmul.bf16.gmra.mxu0 %v1180
      %v1499 = vpop.f32.mrf.mxu0
      %v1500 = vadd.f32 %v1229, %v1499
      %v1501 = vpop.f32.mrf.mxu0
      %v1502 = vadd.f32 %v1229, %v1501
      %1503 = vmatmul.bf16.gmra.mxu0 %v1181
      %v1504 = vpop.f32.mrf.mxu0
      %v1505 = vadd.f32 %v1229, %v1504
      %v1506 = vpop.f32.mrf.mxu0
      %v1507 = vadd.f32 %v1229, %v1506
      %1508 = vmatmul.bf16.gmra.mxu0 %v1182
      %v1509 = vpop.f32.mrf.mxu0
      %v1510 = vadd.f32 %v1229, %v1509
      %v1511 = vpop.f32.mrf.mxu0
      %v1512 = vadd.f32 %v1229, %v1511
      %1513 = vmatmul.bf16.gmra.mxu0 %v1183
      %v1514 = vpop.f32.mrf.mxu0
      %v1515 = vadd.f32 %v1229, %v1514
      %v1516 = vpop.f32.mrf.mxu0
      %v1517 = vadd.f32 %v1229, %v1516
      %1518 = vmatmul.bf16.gmra.mxu0 %v1184
      %v1519 = vpop.f32.mrf.mxu0
      %v1520 = vadd.f32 %v1229, %v1519
      %v1521 = vpop.f32.mrf.mxu0
      %v1522 = vadd.f32 %v1229, %v1521
      %1523 = vmatmul.bf16.gmra.mxu0 %v1185
      %v1524 = vpop.f32.mrf.mxu0
      %v1525 = vadd.f32 %v1229, %v1524
      %v1526 = vpop.f32.mrf.mxu0
      %v1527 = vadd.f32 %v1229, %v1526
      %1528 = vmatmul.bf16.gmra.mxu0 %v1186
      %v1529 = vpop.f32.mrf.mxu0
      %v1530 = vadd.f32 %v1229, %v1529
      %v1531 = vpop.f32.mrf.mxu0
      %v1532 = vadd.f32 %v1229, %v1531
      %1533 = vmatmul.bf16.gmra.mxu0 %v1187
      %v1534 = vpop.f32.mrf.mxu0
      %v1535 = vadd.f32 %v1229, %v1534
      %v1536 = vpop.f32.mrf.mxu0
      %v1537 = vadd.f32 %v1229, %v1536
      %1538 = vmatmul.bf16.gmra.mxu0 %v1188
      %v1539 = vpop.f32.mrf.mxu0
      %v1540 = vadd.f32 %v1229, %v1539
      %v1541 = vpop.f32.mrf.mxu0
      %v1542 = vadd.f32 %v1229, %v1541
      %1543 = vmatmul.bf16.gmra.mxu0 %v1189
      %v1544 = vpop.f32.mrf.mxu0
      %v1545 = vadd.f32 %v1229, %v1544
      %v1546 = vpop.f32.mrf.mxu0
      %v1547 = vadd.f32 %v1229, %v1546
      %1548 = vmatmul.bf16.gmra.mxu0 %v1190
      %v1549 = vpop.f32.mrf.mxu0
      %v1550 = vadd.f32 %v1229, %v1549
      %v1551 = vpop.f32.mrf.mxu0
      %v1552 = vadd.f32 %v1229, %v1551
      %1553 = vmatmul.bf16.gmra.mxu0 %v1191
      %v1554 = vpop.f32.mrf.mxu0
      %v1555 = vadd.f32 %v1229, %v1554
      %v1556 = vpop.f32.mrf.mxu0
      %v1557 = vadd.f32 %v1229, %v1556
      %1558 = vmatmul.bf16.gmra.mxu0 %v1192
      %v1559 = vpop.f32.mrf.mxu0
      %v1560 = vadd.f32 %v1229, %v1559
      %v1561 = vpop.f32.mrf.mxu0
      %v1562 = vadd.f32 %v1229, %v1561
      %1563 = vmatmul.bf16.gmra.mxu0 %v1193
      %v1564 = vpop.f32.mrf.mxu0
      %v1565 = vadd.f32 %v1229, %v1564
      %v1566 = vpop.f32.mrf.mxu0
      %v1567 = vadd.f32 %v1229, %v1566
      %1568 = vmatmul.bf16.gmra.mxu0 %v1194
      %v1569 = vpop.f32.mrf.mxu0
      %v1570 = vadd.f32 %v1229, %v1569
      %v1571 = vpop.f32.mrf.mxu0
      %v1572 = vadd.f32 %v1229, %v1571
      %1573 = vdwg.mxu0
      %1574 = vmatpush.bf16.msra.mxu0 %v1362
      %1575 = vmatpush.bf16.msra.mxu0 %v1358
      %1576 = vmatpush.bf16.msra.mxu0 %v1354
      %1577 = vmatpush.bf16.msra.mxu0 %v1350
      %1578 = vmatpush.bf16.msra.mxu0 %v1346
      %1579 = vmatpush.bf16.msra.mxu0 %v1342
      %1580 = vmatpush.bf16.msra.mxu0 %v1338
      %1581 = vmatpush.bf16.msra.mxu0 %v1334
      %1582 = vmatmul.bf16.gmra.mxu0 %v1179
      %v1583 = vpop.f32.mrf.mxu0
      %v1584 = vadd.f32 %v1230, %v1583
      %v1585 = vpop.f32.mrf.mxu0
      %v1586 = vadd.f32 %v1230, %v1585
      %1587 = vmatmul.bf16.gmra.mxu0 %v1180
      %v1588 = vpop.f32.mrf.mxu0
      %v1589 = vadd.f32 %v1230, %v1588
      %v1590 = vpop.f32.mrf.mxu0
      %v1591 = vadd.f32 %v1230, %v1590
      %1592 = vmatmul.bf16.gmra.mxu0 %v1181
      %v1593 = vpop.f32.mrf.mxu0
      %v1594 = vadd.f32 %v1230, %v1593
      %v1595 = vpop.f32.mrf.mxu0
      %v1596 = vadd.f32 %v1230, %v1595
      %1597 = vmatmul.bf16.gmra.mxu0 %v1182
      %v1598 = vpop.f32.mrf.mxu0
      %v1599 = vadd.f32 %v1230, %v1598
      %v1600 = vpop.f32.mrf.mxu0
      %v1601 = vadd.f32 %v1230, %v1600
      %1602 = vmatmul.bf16.gmra.mxu0 %v1183
      %v1603 = vpop.f32.mrf.mxu0
      %v1604 = vadd.f32 %v1230, %v1603
      %v1605 = vpop.f32.mrf.mxu0
      %v1606 = vadd.f32 %v1230, %v1605
      %1607 = vmatmul.bf16.gmra.mxu0 %v1184
      %v1608 = vpop.f32.mrf.mxu0
      %v1609 = vadd.f32 %v1230, %v1608
      %v1610 = vpop.f32.mrf.mxu0
      %v1611 = vadd.f32 %v1230, %v1610
      %1612 = vmatmul.bf16.gmra.mxu0 %v1185
      %v1613 = vpop.f32.mrf.mxu0
      %v1614 = vadd.f32 %v1230, %v1613
      %v1615 = vpop.f32.mrf.mxu0
      %v1616 = vadd.f32 %v1230, %v1615
      %1617 = vmatmul.bf16.gmra.mxu0 %v1186
      %v1618 = vpop.f32.mrf.mxu0
      %v1619 = vadd.f32 %v1230, %v1618
      %v1620 = vpop.f32.mrf.mxu0
      %v1621 = vadd.f32 %v1230, %v1620
      %1622 = vmatmul.bf16.gmra.mxu0 %v1187
      %v1623 = vpop.f32.mrf.mxu0
      %v1624 = vadd.f32 %v1230, %v1623
      %v1625 = vpop.f32.mrf.mxu0
      %v1626 = vadd.f32 %v1230, %v1625
      %1627 = vmatmul.bf16.gmra.mxu0 %v1188
      %v1628 = vpop.f32.mrf.mxu0
      %v1629 = vadd.f32 %v1230, %v1628
      %v1630 = vpop.f32.mrf.mxu0
      %v1631 = vadd.f32 %v1230, %v1630
      %1632 = vmatmul.bf16.gmra.mxu0 %v1189
      %v1633 = vpop.f32.mrf.mxu0
      %v1634 = vadd.f32 %v1230, %v1633
      %v1635 = vpop.f32.mrf.mxu0
      %v1636 = vadd.f32 %v1230, %v1635
      %1637 = vmatmul.bf16.gmra.mxu0 %v1190
      %v1638 = vpop.f32.mrf.mxu0
      %v1639 = vadd.f32 %v1230, %v1638
      %v1640 = vpop.f32.mrf.mxu0
      %v1641 = vadd.f32 %v1230, %v1640
      %1642 = vmatmul.bf16.gmra.mxu0 %v1191
      %v1643 = vpop.f32.mrf.mxu0
      %v1644 = vadd.f32 %v1230, %v1643
      %v1645 = vpop.f32.mrf.mxu0
      %v1646 = vadd.f32 %v1230, %v1645
      %1647 = vmatmul.bf16.gmra.mxu0 %v1192
      %v1648 = vpop.f32.mrf.mxu0
      %v1649 = vadd.f32 %v1230, %v1648
      %v1650 = vpop.f32.mrf.mxu0
      %v1651 = vadd.f32 %v1230, %v1650
      %1652 = vmatmul.bf16.gmra.mxu0 %v1193
      %v1653 = vpop.f32.mrf.mxu0
      %v1654 = vadd.f32 %v1230, %v1653
      %v1655 = vpop.f32.mrf.mxu0
      %v1656 = vadd.f32 %v1230, %v1655
      %1657 = vmatmul.bf16.gmra.mxu0 %v1194
      %v1658 = vpop.f32.mrf.mxu0
      %v1659 = vadd.f32 %v1230, %v1658
      %v1660 = vpop.f32.mrf.mxu0
      %v1661 = vadd.f32 %v1230, %v1660
      %1662 = vdwg.mxu0
      %1663 = vmatpush.bf16.msra.mxu0 %v1363
      %1664 = vmatpush.bf16.msra.mxu0 %v1359
      %1665 = vmatpush.bf16.msra.mxu0 %v1355
      %1666 = vmatpush.bf16.msra.mxu0 %v1351
      %1667 = vmatpush.bf16.msra.mxu0 %v1347
      %1668 = vmatpush.bf16.msra.mxu0 %v1343
      %1669 = vmatpush.bf16.msra.mxu0 %v1339
      %1670 = vmatpush.bf16.msra.mxu0 %v1335
      %1671 = vmatmul.bf16.gmra.mxu0 %v1179
      %v1672 = vpop.f32.mrf.mxu0
      %v1673 = vadd.f32 %v1231, %v1672
      %v1674 = vpop.f32.mrf.mxu0
      %v1675 = vadd.f32 %v1231, %v1674
      %1676 = vmatmul.bf16.gmra.mxu0 %v1180
      %v1677 = vpop.f32.mrf.mxu0
      %v1678 = vadd.f32 %v1231, %v1677
      %v1679 = vpop.f32.mrf.mxu0
      %v1680 = vadd.f32 %v1231, %v1679
      %1681 = vmatmul.bf16.gmra.mxu0 %v1181
      %v1682 = vpop.f32.mrf.mxu0
      %v1683 = vadd.f32 %v1231, %v1682
      %v1684 = vpop.f32.mrf.mxu0
      %v1685 = vadd.f32 %v1231, %v1684
      %1686 = vmatmul.bf16.gmra.mxu0 %v1182
      %v1687 = vpop.f32.mrf.mxu0
      %v1688 = vadd.f32 %v1231, %v1687
      %v1689 = vpop.f32.mrf.mxu0
      %v1690 = vadd.f32 %v1231, %v1689
      %1691 = vmatmul.bf16.gmra.mxu0 %v1183
      %v1692 = vpop.f32.mrf.mxu0
      %v1693 = vadd.f32 %v1231, %v1692
      %v1694 = vpop.f32.mrf.mxu0
      %v1695 = vadd.f32 %v1231, %v1694
      %1696 = vmatmul.bf16.gmra.mxu0 %v1184
      %v1697 = vpop.f32.mrf.mxu0
      %v1698 = vadd.f32 %v1231, %v1697
      %v1699 = vpop.f32.mrf.mxu0
      %v1700 = vadd.f32 %v1231, %v1699
      %1701 = vmatmul.bf16.gmra.mxu0 %v1185
      %v1702 = vpop.f32.mrf.mxu0
      %v1703 = vadd.f32 %v1231, %v1702
      %v1704 = vpop.f32.mrf.mxu0
      %v1705 = vadd.f32 %v1231, %v1704
      %1706 = vmatmul.bf16.gmra.mxu0 %v1186
      %v1707 = vpop.f32.mrf.mxu0
      %v1708 = vadd.f32 %v1231, %v1707
      %v1709 = vpop.f32.mrf.mxu0
      %v1710 = vadd.f32 %v1231, %v1709
      %1711 = vmatmul.bf16.gmra.mxu0 %v1187
      %v1712 = vpop.f32.mrf.mxu0
      %v1713 = vadd.f32 %v1231, %v1712
      %v1714 = vpop.f32.mrf.mxu0
      %v1715 = vadd.f32 %v1231, %v1714
      %1716 = vmatmul.bf16.gmra.mxu0 %v1188
      %v1717 = vpop.f32.mrf.mxu0
      %v1718 = vadd.f32 %v1231, %v1717
      %v1719 = vpop.f32.mrf.mxu0
      %v1720 = vadd.f32 %v1231, %v1719
      %1721 = vmatmul.bf16.gmra.mxu0 %v1189
      %v1722 = vpop.f32.mrf.mxu0
      %v1723 = vadd.f32 %v1231, %v1722
      %v1724 = vpop.f32.mrf.mxu0
      %v1725 = vadd.f32 %v1231, %v1724
      %1726 = vmatmul.bf16.gmra.mxu0 %v1190
      %v1727 = vpop.f32.mrf.mxu0
      %v1728 = vadd.f32 %v1231, %v1727
      %v1729 = vpop.f32.mrf.mxu0
      %v1730 = vadd.f32 %v1231, %v1729
      %1731 = vmatmul.bf16.gmra.mxu0 %v1191
      %v1732 = vpop.f32.mrf.mxu0
      %v1733 = vadd.f32 %v1231, %v1732
      %v1734 = vpop.f32.mrf.mxu0
      %v1735 = vadd.f32 %v1231, %v1734
      %1736 = vmatmul.bf16.gmra.mxu0 %v1192
      %v1737 = vpop.f32.mrf.mxu0
      %v1738 = vadd.f32 %v1231, %v1737
      %v1739 = vpop.f32.mrf.mxu0
      %v1740 = vadd.f32 %v1231, %v1739
      %1741 = vmatmul.bf16.gmra.mxu0 %v1193
      %v1742 = vpop.f32.mrf.mxu0
      %v1743 = vadd.f32 %v1231, %v1742
      %v1744 = vpop.f32.mrf.mxu0
      %v1745 = vadd.f32 %v1231, %v1744
      %1746 = vmatmul.bf16.gmra.mxu0 %v1194
      %v1747 = vpop.f32.mrf.mxu0
      %v1748 = vadd.f32 %v1231, %v1747
      %v1749 = vpop.f32.mrf.mxu0
      %v1750 = vadd.f32 %v1231, %v1749
      %1751 = vdwg.mxu0
      %v1752 = vmax.f32 %v1406, 0.0
      %v1753 = vmax.f32 %v1495, 0.0
      %v1754 = vmax.f32 %v1584, 0.0
      %v1755 = vmax.f32 %v1673, 0.0
      %v1756 = vmax.f32 %v1408, 0.0
      %v1757 = vmax.f32 %v1497, 0.0
      %v1758 = vmax.f32 %v1586, 0.0
      %v1759 = vmax.f32 %v1675, 0.0
      %v1760 = vmax.f32 %v1411, 0.0
      %v1761 = vmax.f32 %v1500, 0.0
      %v1762 = vmax.f32 %v1589, 0.0
      %v1763 = vmax.f32 %v1678, 0.0
      %v1764 = vmax.f32 %v1413, 0.0
      %v1765 = vmax.f32 %v1502, 0.0
      %v1766 = vmax.f32 %v1591, 0.0
      %v1767 = vmax.f32 %v1680, 0.0
      %v1768 = vmax.f32 %v1416, 0.0
      %v1769 = vmax.f32 %v1505, 0.0
      %v1770 = vmax.f32 %v1594, 0.0
      %v1771 = vmax.f32 %v1683, 0.0
      %v1772 = vmax.f32 %v1418, 0.0
      %v1773 = vmax.f32 %v1507, 0.0
      %v1774 = vmax.f32 %v1596, 0.0
      %v1775 = vmax.f32 %v1685, 0.0
      %v1776 = vmax.f32 %v1421, 0.0
      %v1777 = vmax.f32 %v1510, 0.0
      %v1778 = vmax.f32 %v1599, 0.0
      %v1779 = vmax.f32 %v1688, 0.0
      %v1780 = vmax.f32 %v1423, 0.0
      %v1781 = vmax.f32 %v1512, 0.0
      %v1782 = vmax.f32 %v1601, 0.0
      %v1783 = vmax.f32 %v1690, 0.0
      %v1784 = vmax.f32 %v1426, 0.0
      %v1785 = vmax.f32 %v1515, 0.0
      %v1786 = vmax.f32 %v1604, 0.0
      %v1787 = vmax.f32 %v1693, 0.0
      %v1788 = vmax.f32 %v1428, 0.0
      %v1789 = vmax.f32 %v1517, 0.0
      %v1790 = vmax.f32 %v1606, 0.0
      %v1791 = vmax.f32 %v1695, 0.0
      %v1792 = vmax.f32 %v1431, 0.0
      %v1793 = vmax.f32 %v1520, 0.0
      %v1794 = vmax.f32 %v1609, 0.0
      %v1795 = vmax.f32 %v1698, 0.0
      %v1796 = vmax.f32 %v1433, 0.0
      %v1797 = vmax.f32 %v1522, 0.0
      %v1798 = vmax.f32 %v1611, 0.0
      %v1799 = vmax.f32 %v1700, 0.0
      %v1800 = vmax.f32 %v1436, 0.0
      %v1801 = vmax.f32 %v1525, 0.0
      %v1802 = vmax.f32 %v1614, 0.0
      %v1803 = vmax.f32 %v1703, 0.0
      %v1804 = vmax.f32 %v1438, 0.0
      %v1805 = vmax.f32 %v1527, 0.0
      %v1806 = vmax.f32 %v1616, 0.0
      %v1807 = vmax.f32 %v1705, 0.0
      %v1808 = vmax.f32 %v1441, 0.0
      %v1809 = vmax.f32 %v1530, 0.0
      %v1810 = vmax.f32 %v1619, 0.0
      %v1811 = vmax.f32 %v1708, 0.0
      %v1812 = vmax.f32 %v1443, 0.0
      %v1813 = vmax.f32 %v1532, 0.0
      %v1814 = vmax.f32 %v1621, 0.0
      %v1815 = vmax.f32 %v1710, 0.0
      %v1816 = vmax.f32 %v1446, 0.0
      %v1817 = vmax.f32 %v1535, 0.0
      %v1818 = vmax.f32 %v1624, 0.0
      %v1819 = vmax.f32 %v1713, 0.0
      %v1820 = vmax.f32 %v1448, 0.0
      %v1821 = vmax.f32 %v1537, 0.0
      %v1822 = vmax.f32 %v1626, 0.0
      %v1823 = vmax.f32 %v1715, 0.0
      %v1824 = vmax.f32 %v1451, 0.0
      %v1825 = vmax.f32 %v1540, 0.0
      %v1826 = vmax.f32 %v1629, 0.0
      %v1827 = vmax.f32 %v1718, 0.0
      %v1828 = vmax.f32 %v1453, 0.0
      %v1829 = vmax.f32 %v1542, 0.0
      %v1830 = vmax.f32 %v1631, 0.0
      %v1831 = vmax.f32 %v1720, 0.0
      %v1832 = vmax.f32 %v1456, 0.0
      %v1833 = vmax.f32 %v1545, 0.0
      %v1834 = vmax.f32 %v1634, 0.0
      %v1835 = vmax.f32 %v1723, 0.0
      %v1836 = vmax.f32 %v1458, 0.0
      %v1837 = vmax.f32 %v1547, 0.0
      %v1838 = vmax.f32 %v1636, 0.0
      %v1839 = vmax.f32 %v1725, 0.0
      %v1840 = vmax.f32 %v1461, 0.0
      %v1841 = vmax.f32 %v1550, 0.0
      %v1842 = vmax.f32 %v1639, 0.0
      %v1843 = vmax.f32 %v1728, 0.0
      %v1844 = vmax.f32 %v1463, 0.0
      %v1845 = vmax.f32 %v1552, 0.0
      %v1846 = vmax.f32 %v1641, 0.0
      %v1847 = vmax.f32 %v1730, 0.0
      %v1848 = vmax.f32 %v1466, 0.0
      %v1849 = vmax.f32 %v1555, 0.0
      %v1850 = vmax.f32 %v1644, 0.0
      %v1851 = vmax.f32 %v1733, 0.0
      %v1852 = vmax.f32 %v1468, 0.0
      %v1853 = vmax.f32 %v1557, 0.0
      %v1854 = vmax.f32 %v1646, 0.0
      %v1855 = vmax.f32 %v1735, 0.0
      %v1856 = vmax.f32 %v1471, 0.0
      %v1857 = vmax.f32 %v1560, 0.0
      %v1858 = vmax.f32 %v1649, 0.0
      %v1859 = vmax.f32 %v1738, 0.0
      %v1860 = vmax.f32 %v1473, 0.0
      %v1861 = vmax.f32 %v1562, 0.0
      %v1862 = vmax.f32 %v1651, 0.0
      %v1863 = vmax.f32 %v1740, 0.0
      %v1864 = vmax.f32 %v1476, 0.0
      %v1865 = vmax.f32 %v1565, 0.0
      %v1866 = vmax.f32 %v1654, 0.0
      %v1867 = vmax.f32 %v1743, 0.0
      %v1868 = vmax.f32 %v1478, 0.0
      %v1869 = vmax.f32 %v1567, 0.0
      %v1870 = vmax.f32 %v1656, 0.0
      %v1871 = vmax.f32 %v1745, 0.0
      %v1872 = vmax.f32 %v1481, 0.0
      %v1873 = vmax.f32 %v1570, 0.0
      %v1874 = vmax.f32 %v1659, 0.0
      %v1875 = vmax.f32 %v1748, 0.0
      %v1876 = vmax.f32 %v1483, 0.0
      %v1877 = vmax.f32 %v1572, 0.0
      %v1878 = vmax.f32 %v1661, 0.0
      %v1879 = vmax.f32 %v1750, 0.0
      %v1880 = vpack.c.bf16 %v1756, %v1752
      %v1881 = vpack.c.bf16 %v1757, %v1753
      %v1882 = vpack.c.bf16 %v1758, %v1754
      %v1883 = vpack.c.bf16 %v1759, %v1755
      %v1884 = vpack.c.bf16 %v1764, %v1760
      %v1885 = vpack.c.bf16 %v1765, %v1761
      %v1886 = vpack.c.bf16 %v1766, %v1762
      %v1887 = vpack.c.bf16 %v1767, %v1763
      %v1888 = vpack.c.bf16 %v1772, %v1768
      %v1889 = vpack.c.bf16 %v1773, %v1769
      %v1890 = vpack.c.bf16 %v1774, %v1770
      %v1891 = vpack.c.bf16 %v1775, %v1771
      %v1892 = vpack.c.bf16 %v1780, %v1776
      %v1893 = vpack.c.bf16 %v1781, %v1777
      %v1894 = vpack.c.bf16 %v1782, %v1778
      %v1895 = vpack.c.bf16 %v1783, %v1779
      %v1896 = vpack.c.bf16 %v1788, %v1784
      %v1897 = vpack.c.bf16 %v1789, %v1785
      %v1898 = vpack.c.bf16 %v1790, %v1786
      %v1899 = vpack.c.bf16 %v1791, %v1787
      %v1900 = vpack.c.bf16 %v1796, %v1792
      %v1901 = vpack.c.bf16 %v1797, %v1793
      %v1902 = vpack.c.bf16 %v1798, %v1794
      %v1903 = vpack.c.bf16 %v1799, %v1795
      %v1904 = vpack.c.bf16 %v1804, %v1800
      %v1905 = vpack.c.bf16 %v1805, %v1801
      %v1906 = vpack.c.bf16 %v1806, %v1802
      %v1907 = vpack.c.bf16 %v1807, %v1803
      %v1908 = vpack.c.bf16 %v1812, %v1808
      %v1909 = vpack.c.bf16 %v1813, %v1809
      %v1910 = vpack.c.bf16 %v1814, %v1810
      %v1911 = vpack.c.bf16 %v1815, %v1811
      %v1912 = vpack.c.bf16 %v1820, %v1816
      %v1913 = vpack.c.bf16 %v1821, %v1817
      %v1914 = vpack.c.bf16 %v1822, %v1818
      %v1915 = vpack.c.bf16 %v1823, %v1819
      %v1916 = vpack.c.bf16 %v1828, %v1824
      %v1917 = vpack.c.bf16 %v1829, %v1825
      %v1918 = vpack.c.bf16 %v1830, %v1826
      %v1919 = vpack.c.bf16 %v1831, %v1827
      %v1920 = vpack.c.bf16 %v1836, %v1832
      %v1921 = vpack.c.bf16 %v1837, %v1833
      %v1922 = vpack.c.bf16 %v1838, %v1834
      %v1923 = vpack.c.bf16 %v1839, %v1835
      %v1924 = vpack.c.bf16 %v1844, %v1840
      %v1925 = vpack.c.bf16 %v1845, %v1841
      %v1926 = vpack.c.bf16 %v1846, %v1842
      %v1927 = vpack.c.bf16 %v1847, %v1843
      %v1928 = vpack.c.bf16 %v1852, %v1848
      %v1929 = vpack.c.bf16 %v1853, %v1849
      %v1930 = vpack.c.bf16 %v1854, %v1850
      %v1931 = vpack.c.bf16 %v1855, %v1851
      %v1932 = vpack.c.bf16 %v1860, %v1856
      %v1933 = vpack.c.bf16 %v1861, %v1857
      %v1934 = vpack.c.bf16 %v1862, %v1858
      %v1935 = vpack.c.bf16 %v1863, %v1859
      %v1936 = vpack.c.bf16 %v1868, %v1864
      %v1937 = vpack.c.bf16 %v1869, %v1865
      %v1938 = vpack.c.bf16 %v1870, %v1866
      %v1939 = vpack.c.bf16 %v1871, %v1867
      %v1940 = vpack.c.bf16 %v1876, %v1872
      %v1941 = vpack.c.bf16 %v1877, %v1873
      %v1942 = vpack.c.bf16 %v1878, %v1874
      %v1943 = vpack.c.bf16 %v1879, %v1875
      %v1944 = vld [vmem:[%s5] sm:$0xf]
      %v1945 = vld [vmem:[%s5 + $0x4] sm:$0xf]
      %v1946 = vld [vmem:[%s5 + $0x8] sm:$0xf]
      %v1947 = vld [vmem:[%s5 + $0xc] sm:$0xf]
      %v1948 = vld [vmem:[%s5 + $0x10] sm:$0xf]
      %v1949 = vld [vmem:[%s5 + $0x14] sm:$0xf]
      %v1950 = vld [vmem:[%s5 + $0x18] sm:$0xf]
      %v1951 = vld [vmem:[%s5 + $0x1c] sm:$0xf]
      %v1952 = vld [vmem:[%s5 + $0x20] sm:$0xf]
      %v1953 = vld [vmem:[%s5 + $0x24] sm:$0xf]
      %v1954 = vld [vmem:[%s5 + $0x28] sm:$0xf]
      %v1955 = vld [vmem:[%s5 + $0x2c] sm:$0xf]
      %v1956 = vld [vmem:[%s5 + $0x30] sm:$0xf]
      %v1957 = vld [vmem:[%s5 + $0x34] sm:$0xf]
      %v1958 = vld [vmem:[%s5 + $0x38] sm:$0xf]
      %v1959 = vld [vmem:[%s5 + $0x3c] sm:$0xf]
      %v1960 = vld [vmem:[%s5 + $0x40] sm:$0xf]
      %v1961 = vld [vmem:[%s5 + $0x44] sm:$0xf]
      %v1962 = vld [vmem:[%s5 + $0x48] sm:$0xf]
      %v1963 = vld [vmem:[%s5 + $0x4c] sm:$0xf]
      %v1964 = vld [vmem:[%s5 + $0x50] sm:$0xf]
      %v1965 = vld [vmem:[%s5 + $0x54] sm:$0xf]
      %v1966 = vld [vmem:[%s5 + $0x58] sm:$0xf]
      %v1967 = vld [vmem:[%s5 + $0x5c] sm:$0xf]
      %v1968 = vld [vmem:[%s5 + $0x60] sm:$0xf]
      %v1969 = vld [vmem:[%s5 + $0x64] sm:$0xf]
      %v1970 = vld [vmem:[%s5 + $0x68] sm:$0xf]
      %v1971 = vld [vmem:[%s5 + $0x6c] sm:$0xf]
      %v1972 = vld [vmem:[%s5 + $0x70] sm:$0xf]
      %v1973 = vld [vmem:[%s5 + $0x74] sm:$0xf]
      %v1974 = vld [vmem:[%s5 + $0x78] sm:$0xf]
      %v1975 = vld [vmem:[%s5 + $0x7c] sm:$0xf]
      %v1976 = vld [vmem:[%s5 + $0x80] sm:$0xf]
      %v1977 = vld [vmem:[%s5 + $0x84] sm:$0xf]
      %v1978 = vld [vmem:[%s5 + $0x88] sm:$0xf]
      %v1979 = vld [vmem:[%s5 + $0x8c] sm:$0xf]
      %v1980 = vld [vmem:[%s5 + $0x90] sm:$0xf]
      %v1981 = vld [vmem:[%s5 + $0x94] sm:$0xf]
      %v1982 = vld [vmem:[%s5 + $0x98] sm:$0xf]
      %v1983 = vld [vmem:[%s5 + $0x9c] sm:$0xf]
      %v1984 = vld [vmem:[%s5 + $0xa0] sm:$0xf]
      %v1985 = vld [vmem:[%s5 + $0xa4] sm:$0xf]
      %v1986 = vld [vmem:[%s5 + $0xa8] sm:$0xf]
      %v1987 = vld [vmem:[%s5 + $0xac] sm:$0xf]
      %v1988 = vld [vmem:[%s5 + $0xb0] sm:$0xf]
      %v1989 = vld [vmem:[%s5 + $0xb4] sm:$0xf]
      %v1990 = vld [vmem:[%s5 + $0xb8] sm:$0xf]
      %v1991 = vld [vmem:[%s5 + $0xbc] sm:$0xf]
      %v1992 = vld [vmem:[%s5 + $0xc0] sm:$0xf]
      %v1993 = vld [vmem:[%s5 + $0xc4] sm:$0xf]
      %v1994 = vld [vmem:[%s5 + $0xc8] sm:$0xf]
      %v1995 = vld [vmem:[%s5 + $0xcc] sm:$0xf]
      %v1996 = vld [vmem:[%s5 + $0xd0] sm:$0xf]
      %v1997 = vld [vmem:[%s5 + $0xd4] sm:$0xf]
      %v1998 = vld [vmem:[%s5 + $0xd8] sm:$0xf]
      %v1999 = vld [vmem:[%s5 + $0xdc] sm:$0xf]
      %v2000 = vld [vmem:[%s5 + $0xe0] sm:$0xf]
      %v2001 = vld [vmem:[%s5 + $0xe4] sm:$0xf]
      %v2002 = vld [vmem:[%s5 + $0xe8] sm:$0xf]
      %v2003 = vld [vmem:[%s5 + $0xec] sm:$0xf]
      %v2004 = vld [vmem:[%s5 + $0xf0] sm:$0xf]
      %v2005 = vld [vmem:[%s5 + $0xf4] sm:$0xf]
      %v2006 = vld [vmem:[%s5 + $0xf8] sm:$0xf]
      %v2007 = vld [vmem:[%s5 + $0xfc] sm:$0xf]
      %v2072 = vunpack.c.l.b16 %v1944
      %v2073 = vunpack.c.l.b16 %v1945
      %v2074 = vunpack.c.l.b16 %v1946
      %v2075 = vunpack.c.l.b16 %v1947
      %v2076 = vunpack.c.l.b16 %v1948
      %v2077 = vunpack.c.l.b16 %v1949
      %v2078 = vunpack.c.l.b16 %v1950
      %v2079 = vunpack.c.l.b16 %v1951
      %v2080 = vunpack.c.l.b16 %v1952
      %v2081 = vunpack.c.l.b16 %v1953
      %v2082 = vunpack.c.l.b16 %v1954
      %v2083 = vunpack.c.l.b16 %v1955
      %v2084 = vunpack.c.l.b16 %v1956
      %v2085 = vunpack.c.l.b16 %v1957
      %v2086 = vunpack.c.l.b16 %v1958
      %v2087 = vunpack.c.l.b16 %v1959
      %v2088 = vunpack.c.l.b16 %v1960
      %v2089 = vunpack.c.l.b16 %v1961
      %v2090 = vunpack.c.l.b16 %v1962
      %v2091 = vunpack.c.l.b16 %v1963
      %v2092 = vunpack.c.l.b16 %v1964
      %v2093 = vunpack.c.l.b16 %v1965
      %v2094 = vunpack.c.l.b16 %v1966
      %v2095 = vunpack.c.l.b16 %v1967
      %v2096 = vunpack.c.l.b16 %v1968
      %v2097 = vunpack.c.l.b16 %v1969
      %v2098 = vunpack.c.l.b16 %v1970
      %v2099 = vunpack.c.l.b16 %v1971
      %v2100 = vunpack.c.l.b16 %v1972
      %v2101 = vunpack.c.l.b16 %v1973
      %v2102 = vunpack.c.l.b16 %v1974
      %v2103 = vunpack.c.l.b16 %v1975
      %v2104 = vunpack.c.l.b16 %v1976
      %v2105 = vunpack.c.l.b16 %v1977
      %v2106 = vunpack.c.l.b16 %v1978
      %v2107 = vunpack.c.l.b16 %v1979
      %v2108 = vunpack.c.l.b16 %v1980
      %v2109 = vunpack.c.l.b16 %v1981
      %v2110 = vunpack.c.l.b16 %v1982
      %v2111 = vunpack.c.l.b16 %v1983
      %v2112 = vunpack.c.l.b16 %v1984
      %v2113 = vunpack.c.l.b16 %v1985
      %v2114 = vunpack.c.l.b16 %v1986
      %v2115 = vunpack.c.l.b16 %v1987
      %v2116 = vunpack.c.l.b16 %v1988
      %v2117 = vunpack.c.l.b16 %v1989
      %v2118 = vunpack.c.l.b16 %v1990
      %v2119 = vunpack.c.l.b16 %v1991
      %v2120 = vunpack.c.l.b16 %v1992
      %v2121 = vunpack.c.l.b16 %v1993
      %v2122 = vunpack.c.l.b16 %v1994
      %v2123 = vunpack.c.l.b16 %v1995
      %v2124 = vunpack.c.l.b16 %v1996
      %v2125 = vunpack.c.l.b16 %v1997
      %v2126 = vunpack.c.l.b16 %v1998
      %v2127 = vunpack.c.l.b16 %v1999
      %v2128 = vunpack.c.l.b16 %v2000
      %v2129 = vunpack.c.l.b16 %v2001
      %v2130 = vunpack.c.l.b16 %v2002
      %v2131 = vunpack.c.l.b16 %v2003
      %v2132 = vunpack.c.l.b16 %v2004
      %v2133 = vunpack.c.l.b16 %v2005
      %v2134 = vunpack.c.l.b16 %v2006
      %v2135 = vunpack.c.l.b16 %v2007
      %v2136 = vpack.c.b16 %v2073, %v2072
      %v2137 = vpack.c.b16 %v2075, %v2074
      %v2138 = vpack.c.b16 %v2077, %v2076
      %v2139 = vpack.c.b16 %v2079, %v2078
      %v2140 = vpack.c.b16 %v2081, %v2080
      %v2141 = vpack.c.b16 %v2083, %v2082
      %v2142 = vpack.c.b16 %v2085, %v2084
      %v2143 = vpack.c.b16 %v2087, %v2086
      %v2144 = vpack.c.b16 %v2089, %v2088
      %v2145 = vpack.c.b16 %v2091, %v2090
      %v2146 = vpack.c.b16 %v2093, %v2092
      %v2147 = vpack.c.b16 %v2095, %v2094
      %v2148 = vpack.c.b16 %v2097, %v2096
      %v2149 = vpack.c.b16 %v2099, %v2098
      %v2150 = vpack.c.b16 %v2101, %v2100
      %v2151 = vpack.c.b16 %v2103, %v2102
      %v2152 = vpack.c.b16 %v2105, %v2104
      %v2153 = vpack.c.b16 %v2107, %v2106
      %v2154 = vpack.c.b16 %v2109, %v2108
      %v2155 = vpack.c.b16 %v2111, %v2110
      %v2156 = vpack.c.b16 %v2113, %v2112
      %v2157 = vpack.c.b16 %v2115, %v2114
      %v2158 = vpack.c.b16 %v2117, %v2116
      %v2159 = vpack.c.b16 %v2119, %v2118
      %v2160 = vpack.c.b16 %v2121, %v2120
      %v2161 = vpack.c.b16 %v2123, %v2122
      %v2162 = vpack.c.b16 %v2125, %v2124
      %v2163 = vpack.c.b16 %v2127, %v2126
      %v2164 = vpack.c.b16 %v2129, %v2128
      %v2165 = vpack.c.b16 %v2131, %v2130
      %v2166 = vpack.c.b16 %v2133, %v2132
      %v2167 = vpack.c.b16 %v2135, %v2134
      %2200 = vmatpush.bf16.msra.mxu0 %v2143
      %2201 = vmatpush.bf16.msra.mxu0 %v2142
      %2202 = vmatpush.bf16.msra.mxu0 %v2141
      %2203 = vmatpush.bf16.msra.mxu0 %v2140
      %2204 = vmatpush.bf16.msra.mxu0 %v2139
      %2205 = vmatpush.bf16.msra.mxu0 %v2138
      %2206 = vmatpush.bf16.msra.mxu0 %v2137
      %2207 = vmatpush.bf16.msra.mxu0 %v2136
      %2208 = vmatmul.bf16.gmra.mxu0 %v1880
      %v2209 = vpop.f32.mrf.mxu0
      %v2210 = vadd.f32 %v295, %v2209
      %v2211 = vpop.f32.mrf.mxu0
      %v2212 = vadd.f32 %v295, %v2211
      %2213 = vmatmul.bf16.gmra.mxu0 %v1884
      %v2214 = vpop.f32.mrf.mxu0
      %v2215 = vadd.f32 %v295, %v2214
      %v2216 = vpop.f32.mrf.mxu0
      %v2217 = vadd.f32 %v295, %v2216
      %2218 = vmatmul.bf16.gmra.mxu0 %v1888
      %v2219 = vpop.f32.mrf.mxu0
      %v2220 = vadd.f32 %v295, %v2219
      %v2221 = vpop.f32.mrf.mxu0
      %v2222 = vadd.f32 %v295, %v2221
      %2223 = vmatmul.bf16.gmra.mxu0 %v1892
      %v2224 = vpop.f32.mrf.mxu0
      %v2225 = vadd.f32 %v295, %v2224
      %v2226 = vpop.f32.mrf.mxu0
      %v2227 = vadd.f32 %v295, %v2226
      %2228 = vmatmul.bf16.gmra.mxu0 %v1896
      %v2229 = vpop.f32.mrf.mxu0
      %v2230 = vadd.f32 %v295, %v2229
      %v2231 = vpop.f32.mrf.mxu0
      %v2232 = vadd.f32 %v295, %v2231
      %2233 = vmatmul.bf16.gmra.mxu0 %v1900
      %v2234 = vpop.f32.mrf.mxu0
      %v2235 = vadd.f32 %v295, %v2234
      %v2236 = vpop.f32.mrf.mxu0
      %v2237 = vadd.f32 %v295, %v2236
      %2238 = vmatmul.bf16.gmra.mxu0 %v1904
      %v2239 = vpop.f32.mrf.mxu0
      %v2240 = vadd.f32 %v295, %v2239
      %v2241 = vpop.f32.mrf.mxu0
      %v2242 = vadd.f32 %v295, %v2241
      %2243 = vmatmul.bf16.gmra.mxu0 %v1908
      %v2244 = vpop.f32.mrf.mxu0
      %v2245 = vadd.f32 %v295, %v2244
      %v2246 = vpop.f32.mrf.mxu0
      %v2247 = vadd.f32 %v295, %v2246
      %2248 = vmatmul.bf16.gmra.mxu0 %v1912
      %v2249 = vpop.f32.mrf.mxu0
      %v2250 = vadd.f32 %v295, %v2249
      %v2251 = vpop.f32.mrf.mxu0
      %v2252 = vadd.f32 %v295, %v2251
      %2253 = vmatmul.bf16.gmra.mxu0 %v1916
      %v2254 = vpop.f32.mrf.mxu0
      %v2255 = vadd.f32 %v295, %v2254
      %v2256 = vpop.f32.mrf.mxu0
      %v2257 = vadd.f32 %v295, %v2256
      %2258 = vmatmul.bf16.gmra.mxu0 %v1920
      %v2259 = vpop.f32.mrf.mxu0
      %v2260 = vadd.f32 %v295, %v2259
      %v2261 = vpop.f32.mrf.mxu0
      %v2262 = vadd.f32 %v295, %v2261
      %2263 = vmatmul.bf16.gmra.mxu0 %v1924
      %v2264 = vpop.f32.mrf.mxu0
      %v2265 = vadd.f32 %v295, %v2264
      %v2266 = vpop.f32.mrf.mxu0
      %v2267 = vadd.f32 %v295, %v2266
      %2268 = vmatmul.bf16.gmra.mxu0 %v1928
      %v2269 = vpop.f32.mrf.mxu0
      %v2270 = vadd.f32 %v295, %v2269
      %v2271 = vpop.f32.mrf.mxu0
      %v2272 = vadd.f32 %v295, %v2271
      %2273 = vmatmul.bf16.gmra.mxu0 %v1932
      %v2274 = vpop.f32.mrf.mxu0
      %v2275 = vadd.f32 %v295, %v2274
      %v2276 = vpop.f32.mrf.mxu0
      %v2277 = vadd.f32 %v295, %v2276
      %2278 = vmatmul.bf16.gmra.mxu0 %v1936
      %v2279 = vpop.f32.mrf.mxu0
      %v2280 = vadd.f32 %v295, %v2279
      %v2281 = vpop.f32.mrf.mxu0
      %v2282 = vadd.f32 %v295, %v2281
      %2283 = vmatmul.bf16.gmra.mxu0 %v1940
      %v2284 = vpop.f32.mrf.mxu0
      %v2285 = vadd.f32 %v295, %v2284
      %v2286 = vpop.f32.mrf.mxu0
      %v2287 = vadd.f32 %v295, %v2286
      %2288 = vdwg.mxu0
      %2289 = vmatpush.bf16.msra.mxu0 %v2151
      %2290 = vmatpush.bf16.msra.mxu0 %v2150
      %2291 = vmatpush.bf16.msra.mxu0 %v2149
      %2292 = vmatpush.bf16.msra.mxu0 %v2148
      %2293 = vmatpush.bf16.msra.mxu0 %v2147
      %2294 = vmatpush.bf16.msra.mxu0 %v2146
      %2295 = vmatpush.bf16.msra.mxu0 %v2145
      %2296 = vmatpush.bf16.msra.mxu0 %v2144
      %2297 = vmatmul.bf16.gmra.mxu0 %v1881
      %v2298 = vpop.f32.mrf.mxu0
      %v2299 = vadd.f32 %v2210, %v2298
      %v2300 = vpop.f32.mrf.mxu0
      %v2301 = vadd.f32 %v2212, %v2300
      %2302 = vmatmul.bf16.gmra.mxu0 %v1885
      %v2303 = vpop.f32.mrf.mxu0
      %v2304 = vadd.f32 %v2215, %v2303
      %v2305 = vpop.f32.mrf.mxu0
      %v2306 = vadd.f32 %v2217, %v2305
      %2307 = vmatmul.bf16.gmra.mxu0 %v1889
      %v2308 = vpop.f32.mrf.mxu0
      %v2309 = vadd.f32 %v2220, %v2308
      %v2310 = vpop.f32.mrf.mxu0
      %v2311 = vadd.f32 %v2222, %v2310
      %2312 = vmatmul.bf16.gmra.mxu0 %v1893
      %v2313 = vpop.f32.mrf.mxu0
      %v2314 = vadd.f32 %v2225, %v2313
      %v2315 = vpop.f32.mrf.mxu0
      %v2316 = vadd.f32 %v2227, %v2315
      %2317 = vmatmul.bf16.gmra.mxu0 %v1897
      %v2318 = vpop.f32.mrf.mxu0
      %v2319 = vadd.f32 %v2230, %v2318
      %v2320 = vpop.f32.mrf.mxu0
      %v2321 = vadd.f32 %v2232, %v2320
      %2322 = vmatmul.bf16.gmra.mxu0 %v1901
      %v2323 = vpop.f32.mrf.mxu0
      %v2324 = vadd.f32 %v2235, %v2323
      %v2325 = vpop.f32.mrf.mxu0
      %v2326 = vadd.f32 %v2237, %v2325
      %2327 = vmatmul.bf16.gmra.mxu0 %v1905
      %v2328 = vpop.f32.mrf.mxu0
      %v2329 = vadd.f32 %v2240, %v2328
      %v2330 = vpop.f32.mrf.mxu0
      %v2331 = vadd.f32 %v2242, %v2330
      %2332 = vmatmul.bf16.gmra.mxu0 %v1909
      %v2333 = vpop.f32.mrf.mxu0
      %v2334 = vadd.f32 %v2245, %v2333
      %v2335 = vpop.f32.mrf.mxu0
      %v2336 = vadd.f32 %v2247, %v2335
      %2337 = vmatmul.bf16.gmra.mxu0 %v1913
      %v2338 = vpop.f32.mrf.mxu0
      %v2339 = vadd.f32 %v2250, %v2338
      %v2340 = vpop.f32.mrf.mxu0
      %v2341 = vadd.f32 %v2252, %v2340
      %2342 = vmatmul.bf16.gmra.mxu0 %v1917
      %v2343 = vpop.f32.mrf.mxu0
      %v2344 = vadd.f32 %v2255, %v2343
      %v2345 = vpop.f32.mrf.mxu0
      %v2346 = vadd.f32 %v2257, %v2345
      %2347 = vmatmul.bf16.gmra.mxu0 %v1921
      %v2348 = vpop.f32.mrf.mxu0
      %v2349 = vadd.f32 %v2260, %v2348
      %v2350 = vpop.f32.mrf.mxu0
      %v2351 = vadd.f32 %v2262, %v2350
      %2352 = vmatmul.bf16.gmra.mxu0 %v1925
      %v2353 = vpop.f32.mrf.mxu0
      %v2354 = vadd.f32 %v2265, %v2353
      %v2355 = vpop.f32.mrf.mxu0
      %v2356 = vadd.f32 %v2267, %v2355
      %2357 = vmatmul.bf16.gmra.mxu0 %v1929
      %v2358 = vpop.f32.mrf.mxu0
      %v2359 = vadd.f32 %v2270, %v2358
      %v2360 = vpop.f32.mrf.mxu0
      %v2361 = vadd.f32 %v2272, %v2360
      %2362 = vmatmul.bf16.gmra.mxu0 %v1933
      %v2363 = vpop.f32.mrf.mxu0
      %v2364 = vadd.f32 %v2275, %v2363
      %v2365 = vpop.f32.mrf.mxu0
      %v2366 = vadd.f32 %v2277, %v2365
      %2367 = vmatmul.bf16.gmra.mxu0 %v1937
      %v2368 = vpop.f32.mrf.mxu0
      %v2369 = vadd.f32 %v2280, %v2368
      %v2370 = vpop.f32.mrf.mxu0
      %v2371 = vadd.f32 %v2282, %v2370
      %2372 = vmatmul.bf16.gmra.mxu0 %v1941
      %v2373 = vpop.f32.mrf.mxu0
      %v2374 = vadd.f32 %v2285, %v2373
      %v2375 = vpop.f32.mrf.mxu0
      %v2376 = vadd.f32 %v2287, %v2375
      %2377 = vdwg.mxu0
      %2378 = vmatpush.bf16.msra.mxu0 %v2159
      %2379 = vmatpush.bf16.msra.mxu0 %v2158
      %2380 = vmatpush.bf16.msra.mxu0 %v2157
      %2381 = vmatpush.bf16.msra.mxu0 %v2156
      %2382 = vmatpush.bf16.msra.mxu0 %v2155
      %2383 = vmatpush.bf16.msra.mxu0 %v2154
      %2384 = vmatpush.bf16.msra.mxu0 %v2153
      %2385 = vmatpush.bf16.msra.mxu0 %v2152
      %2386 = vmatmul.bf16.gmra.mxu0 %v1882
      %v2387 = vpop.f32.mrf.mxu0
      %v2388 = vadd.f32 %v2299, %v2387
      %v2389 = vpop.f32.mrf.mxu0
      %v2390 = vadd.f32 %v2301, %v2389
      %2391 = vmatmul.bf16.gmra.mxu0 %v1886
      %v2392 = vpop.f32.mrf.mxu0
      %v2393 = vadd.f32 %v2304, %v2392
      %v2394 = vpop.f32.mrf.mxu0
      %v2395 = vadd.f32 %v2306, %v2394
      %2396 = vmatmul.bf16.gmra.mxu0 %v1890
      %v2397 = vpop.f32.mrf.mxu0
      %v2398 = vadd.f32 %v2309, %v2397
      %v2399 = vpop.f32.mrf.mxu0
      %v2400 = vadd.f32 %v2311, %v2399
      %2401 = vmatmul.bf16.gmra.mxu0 %v1894
      %v2402 = vpop.f32.mrf.mxu0
      %v2403 = vadd.f32 %v2314, %v2402
      %v2404 = vpop.f32.mrf.mxu0
      %v2405 = vadd.f32 %v2316, %v2404
      %2406 = vmatmul.bf16.gmra.mxu0 %v1898
      %v2407 = vpop.f32.mrf.mxu0
      %v2408 = vadd.f32 %v2319, %v2407
      %v2409 = vpop.f32.mrf.mxu0
      %v2410 = vadd.f32 %v2321, %v2409
      %2411 = vmatmul.bf16.gmra.mxu0 %v1902
      %v2412 = vpop.f32.mrf.mxu0
      %v2413 = vadd.f32 %v2324, %v2412
      %v2414 = vpop.f32.mrf.mxu0
      %v2415 = vadd.f32 %v2326, %v2414
      %2416 = vmatmul.bf16.gmra.mxu0 %v1906
      %v2417 = vpop.f32.mrf.mxu0
      %v2418 = vadd.f32 %v2329, %v2417
      %v2419 = vpop.f32.mrf.mxu0
      %v2420 = vadd.f32 %v2331, %v2419
      %2421 = vmatmul.bf16.gmra.mxu0 %v1910
      %v2422 = vpop.f32.mrf.mxu0
      %v2423 = vadd.f32 %v2334, %v2422
      %v2424 = vpop.f32.mrf.mxu0
      %v2425 = vadd.f32 %v2336, %v2424
      %2426 = vmatmul.bf16.gmra.mxu0 %v1914
      %v2427 = vpop.f32.mrf.mxu0
      %v2428 = vadd.f32 %v2339, %v2427
      %v2429 = vpop.f32.mrf.mxu0
      %v2430 = vadd.f32 %v2341, %v2429
      %2431 = vmatmul.bf16.gmra.mxu0 %v1918
      %v2432 = vpop.f32.mrf.mxu0
      %v2433 = vadd.f32 %v2344, %v2432
      %v2434 = vpop.f32.mrf.mxu0
      %v2435 = vadd.f32 %v2346, %v2434
      %2436 = vmatmul.bf16.gmra.mxu0 %v1922
      %v2437 = vpop.f32.mrf.mxu0
      %v2438 = vadd.f32 %v2349, %v2437
      %v2439 = vpop.f32.mrf.mxu0
      %v2440 = vadd.f32 %v2351, %v2439
      %2441 = vmatmul.bf16.gmra.mxu0 %v1926
      %v2442 = vpop.f32.mrf.mxu0
      %v2443 = vadd.f32 %v2354, %v2442
      %v2444 = vpop.f32.mrf.mxu0
      %v2445 = vadd.f32 %v2356, %v2444
      %2446 = vmatmul.bf16.gmra.mxu0 %v1930
      %v2447 = vpop.f32.mrf.mxu0
      %v2448 = vadd.f32 %v2359, %v2447
      %v2449 = vpop.f32.mrf.mxu0
      %v2450 = vadd.f32 %v2361, %v2449
      %2451 = vmatmul.bf16.gmra.mxu0 %v1934
      %v2452 = vpop.f32.mrf.mxu0
      %v2453 = vadd.f32 %v2364, %v2452
      %v2454 = vpop.f32.mrf.mxu0
      %v2455 = vadd.f32 %v2366, %v2454
      %2456 = vmatmul.bf16.gmra.mxu0 %v1938
      %v2457 = vpop.f32.mrf.mxu0
      %v2458 = vadd.f32 %v2369, %v2457
      %v2459 = vpop.f32.mrf.mxu0
      %v2460 = vadd.f32 %v2371, %v2459
      %2461 = vmatmul.bf16.gmra.mxu0 %v1942
      %v2462 = vpop.f32.mrf.mxu0
      %v2463 = vadd.f32 %v2374, %v2462
      %v2464 = vpop.f32.mrf.mxu0
      %v2465 = vadd.f32 %v2376, %v2464
      %2466 = vdwg.mxu0
      %2467 = vmatpush.bf16.msra.mxu0 %v2167
      %2468 = vmatpush.bf16.msra.mxu0 %v2166
      %2469 = vmatpush.bf16.msra.mxu0 %v2165
      %2470 = vmatpush.bf16.msra.mxu0 %v2164
      %2471 = vmatpush.bf16.msra.mxu0 %v2163
      %2472 = vmatpush.bf16.msra.mxu0 %v2162
      %2473 = vmatpush.bf16.msra.mxu0 %v2161
      %2474 = vmatpush.bf16.msra.mxu0 %v2160
      %2475 = vmatmul.bf16.gmra.mxu0 %v1883
      %v2476 = vpop.f32.mrf.mxu0
      %v2477 = vadd.f32 %v2388, %v2476
      %v2478 = vpop.f32.mrf.mxu0
      %v2479 = vadd.f32 %v2390, %v2478
      %2480 = vmatmul.bf16.gmra.mxu0 %v1887
      %v2481 = vpop.f32.mrf.mxu0
      %v2482 = vadd.f32 %v2393, %v2481
      %v2483 = vpop.f32.mrf.mxu0
      %v2484 = vadd.f32 %v2395, %v2483
      %2485 = vmatmul.bf16.gmra.mxu0 %v1891
      %v2486 = vpop.f32.mrf.mxu0
      %v2487 = vadd.f32 %v2398, %v2486
      %v2488 = vpop.f32.mrf.mxu0
      %v2489 = vadd.f32 %v2400, %v2488
      %2490 = vmatmul.bf16.gmra.mxu0 %v1895
      %v2491 = vpop.f32.mrf.mxu0
      %v2492 = vadd.f32 %v2403, %v2491
      %v2493 = vpop.f32.mrf.mxu0
      %v2494 = vadd.f32 %v2405, %v2493
      %2495 = vmatmul.bf16.gmra.mxu0 %v1899
      %v2496 = vpop.f32.mrf.mxu0
      %v2497 = vadd.f32 %v2408, %v2496
      %v2498 = vpop.f32.mrf.mxu0
      %v2499 = vadd.f32 %v2410, %v2498
      %2500 = vmatmul.bf16.gmra.mxu0 %v1903
      %v2501 = vpop.f32.mrf.mxu0
      %v2502 = vadd.f32 %v2413, %v2501
      %v2503 = vpop.f32.mrf.mxu0
      %v2504 = vadd.f32 %v2415, %v2503
      %2505 = vmatmul.bf16.gmra.mxu0 %v1907
      %v2506 = vpop.f32.mrf.mxu0
      %v2507 = vadd.f32 %v2418, %v2506
      %v2508 = vpop.f32.mrf.mxu0
      %v2509 = vadd.f32 %v2420, %v2508
      %2510 = vmatmul.bf16.gmra.mxu0 %v1911
      %v2511 = vpop.f32.mrf.mxu0
      %v2512 = vadd.f32 %v2423, %v2511
      %v2513 = vpop.f32.mrf.mxu0
      %v2514 = vadd.f32 %v2425, %v2513
      %2515 = vmatmul.bf16.gmra.mxu0 %v1915
      %v2516 = vpop.f32.mrf.mxu0
      %v2517 = vadd.f32 %v2428, %v2516
      %v2518 = vpop.f32.mrf.mxu0
      %v2519 = vadd.f32 %v2430, %v2518
      %2520 = vmatmul.bf16.gmra.mxu0 %v1919
      %v2521 = vpop.f32.mrf.mxu0
      %v2522 = vadd.f32 %v2433, %v2521
      %v2523 = vpop.f32.mrf.mxu0
      %v2524 = vadd.f32 %v2435, %v2523
      %2525 = vmatmul.bf16.gmra.mxu0 %v1923
      %v2526 = vpop.f32.mrf.mxu0
      %v2527 = vadd.f32 %v2438, %v2526
      %v2528 = vpop.f32.mrf.mxu0
      %v2529 = vadd.f32 %v2440, %v2528
      %2530 = vmatmul.bf16.gmra.mxu0 %v1927
      %v2531 = vpop.f32.mrf.mxu0
      %v2532 = vadd.f32 %v2443, %v2531
      %v2533 = vpop.f32.mrf.mxu0
      %v2534 = vadd.f32 %v2445, %v2533
      %2535 = vmatmul.bf16.gmra.mxu0 %v1931
      %v2536 = vpop.f32.mrf.mxu0
      %v2537 = vadd.f32 %v2448, %v2536
      %v2538 = vpop.f32.mrf.mxu0
      %v2539 = vadd.f32 %v2450, %v2538
      %2540 = vmatmul.bf16.gmra.mxu0 %v1935
      %v2541 = vpop.f32.mrf.mxu0
      %v2542 = vadd.f32 %v2453, %v2541
      %v2543 = vpop.f32.mrf.mxu0
      %v2544 = vadd.f32 %v2455, %v2543
      %2545 = vmatmul.bf16.gmra.mxu0 %v1939
      %v2546 = vpop.f32.mrf.mxu0
      %v2547 = vadd.f32 %v2458, %v2546
      %v2548 = vpop.f32.mrf.mxu0
      %v2549 = vadd.f32 %v2460, %v2548
      %2550 = vmatmul.bf16.gmra.mxu0 %v1943
      %v2551 = vpop.f32.mrf.mxu0
      %v2552 = vadd.f32 %v2463, %v2551
      %v2553 = vpop.f32.mrf.mxu0
      %v2554 = vadd.f32 %v2465, %v2553
      %2555 = vdwg.mxu0
      %vm2556 = vcmask 64512
      %2557 = vst.msk [vmem:[%s253] sm:$0xff] %vm2556, %v2477
      %2558 = vst.msk [vmem:[%s253 + $0x8] sm:$0xff] %vm2556, %v2479
      %2559 = vst.msk [vmem:[%s253 + $0x10] sm:$0xff] %vm2556, %v2482
      %2560 = vst.msk [vmem:[%s253 + $0x18] sm:$0xff] %vm2556, %v2484
      %2561 = vst.msk [vmem:[%s253 + $0x20] sm:$0xff] %vm2556, %v2487
      %2562 = vst.msk [vmem:[%s253 + $0x28] sm:$0xff] %vm2556, %v2489
      %2563 = vst.msk [vmem:[%s253 + $0x30] sm:$0xff] %vm2556, %v2492
      %2564 = vst.msk [vmem:[%s253 + $0x38] sm:$0xff] %vm2556, %v2494
      %2565 = vst.msk [vmem:[%s253 + $0x40] sm:$0xff] %vm2556, %v2497
      %2566 = vst.msk [vmem:[%s253 + $0x48] sm:$0xff] %vm2556, %v2499
      %2567 = vst.msk [vmem:[%s253 + $0x50] sm:$0xff] %vm2556, %v2502
      %2568 = vst.msk [vmem:[%s253 + $0x58] sm:$0xff] %vm2556, %v2504
      %2569 = vst.msk [vmem:[%s253 + $0x60] sm:$0xff] %vm2556, %v2507
      %2570 = vst.msk [vmem:[%s253 + $0x68] sm:$0xff] %vm2556, %v2509
      %2571 = vst.msk [vmem:[%s253 + $0x70] sm:$0xff] %vm2556, %v2512
      %2572 = vst.msk [vmem:[%s253 + $0x78] sm:$0xff] %vm2556, %v2514
      %2573 = vst.msk [vmem:[%s253 + $0x80] sm:$0xff] %vm2556, %v2517
      %2574 = vst.msk [vmem:[%s253 + $0x88] sm:$0xff] %vm2556, %v2519
      %2575 = vst.msk [vmem:[%s253 + $0x90] sm:$0xff] %vm2556, %v2522
      %2576 = vst.msk [vmem:[%s253 + $0x98] sm:$0xff] %vm2556, %v2524
      %2577 = vst.msk [vmem:[%s253 + $0xa0] sm:$0xff] %vm2556, %v2527
      %2578 = vst.msk [vmem:[%s253 + $0xa8] sm:$0xff] %vm2556, %v2529
      %2579 = vst.msk [vmem:[%s253 + $0xb0] sm:$0xff] %vm2556, %v2532
      %2580 = vst.msk [vmem:[%s253 + $0xb8] sm:$0xff] %vm2556, %v2534
      %2581 = vst.msk [vmem:[%s253 + $0xc0] sm:$0xff] %vm2556, %v2537
      %2582 = vst.msk [vmem:[%s253 + $0xc8] sm:$0xff] %vm2556, %v2539
      %2583 = vst.msk [vmem:[%s253 + $0xd0] sm:$0xff] %vm2556, %v2542
      %2584 = vst.msk [vmem:[%s253 + $0xd8] sm:$0xff] %vm2556, %v2544
      %2585 = vst.msk [vmem:[%s253 + $0xe0] sm:$0xff] %vm2556, %v2547
      %2586 = vst.msk [vmem:[%s253 + $0xe8] sm:$0xff] %vm2556, %v2549
      %2587 = vst.msk [vmem:[%s253 + $0xf0] sm:$0xff] %vm2556, %v2552
      %2588 = vst.msk [vmem:[%s253 + $0xf8] sm:$0xff] %vm2556, %v2554
      %s2589 = smul.u32 32, %s17
      %p2590 = scmp.lt.s32.totalorder %s2589, 63
      %s2591 = scalar_select %p2590, %s2589, 63
      %s2592 = smul.addr %s2591, 8
      %s2593 = scalar_lea.vmem %s6, %s2592
      // Predicated region
      $region45: #{tpu_custom_call.1} parent=43 // pred_check
        %p2594 = pneg %p166
      $region46: #{tpu_custom_call.1} parent=43 // pred_check_branch
        %2596 = sbr.rel (%p2594) target = $region48
      $region47: #{tpu_custom_call.1} parent=43 // pred_region
        %s2597 = smul.u32 32, %s17
      $region48: #{tpu_custom_call.1} parent=43 // pred_fallthru
        _
    $region44: #{tpu_custom_call.1} parent=5 // pred_fallthru
      _
    %p2598 = scmp.le.s32.totalorder 2, %s12
    // Predicated region
    $region49: #{tpu_custom_call.1} parent=5 // pred_check
      %p2599 = pneg %p2598
    $region50: #{tpu_custom_call.1} parent=5 // pred_check_branch
      %2601 = sbr.rel (%p2599) target = $region52
    $region51: #{tpu_custom_call.1} parent=5 // pred_region
      %s2602 = ssub.s32 %s12, 2
      // Predicated region
      $region53: #{tpu_custom_call.1} parent=51 // pred_check
        %p2603 = pneg %p172
      $region54: #{tpu_custom_call.1} parent=51 // pred_check_branch
        %2605 = sbr.rel (%p2603) target = $region56
      $region55: #{tpu_custom_call.1} parent=51 // pred_region
        %s2606 = smul.u32 32, %s18
        %p2607 = scmp.lt.s32.totalorder %s2606, 63
        %s2608 = scalar_select %p2607, %s2606, 63
        %s2609 = smul.addr %s2608, 8
        %s2610 = scalar_lea.vmem %s6, %s2609
      $region56: #{tpu_custom_call.1} parent=51 // pred_fallthru
        _
    $region52: #{tpu_custom_call.1} parent=5 // pred_fallthru
      _
  $region6: #{tpu_custom_call.1} parent=0 // loop_footer
    %s16 = sadd.s32 1, %s12
  $region7: #{tpu_custom_call.1} parent=0 // loop_footer_branch
    %11 = sbr.rel target = $region3
  $region8: #{tpu_custom_call.1} parent=0 // loop_exit
    _

</llo_original>
